<compile_context>
chip_gen: v6e
topology: v6e:2x2x1
jax: 0.10.0
libtpu: 0.0.40
codegen_flags: <defaults>
</compile_context>

<pallas_src>
import functools

import jax
import jax.numpy as jnp
from jax import lax
from jax.experimental import pallas as pl
from jax.experimental.pallas import tpu as pltpu


def _round_up(x, m):
    return ((x + m - 1) // m) * m


# ---------------------------------------------------------------------------
# Kernel 1: GRU + MF attention (online softmax), time-chunked + batch-blocked
# grid = (B_pad // TB  ["parallel"],  L_pad // TL  ["arbitrary"])
# ---------------------------------------------------------------------------
def _ssrm_sr_kernel(emb_ref, feat_u_ref, lens_ref, w_i_ref, w_h_ref,
                    b_x_ref, b_h_ref, sr_ref,
                    xp_ref, h_ref, m_ref, l_ref, acc_ref,
                    *, w_combine, tl):
    TB, D = feat_u_ref.shape
    t_blk = pl.program_id(1)
    n_blk = pl.num_programs(1)

    # (Re-)initialize the per-batch-block carry at the start of each session.
    @pl.when(t_blk == 0)
    def _():
        h_ref[...] = jnp.zeros_like(h_ref)
        m_ref[...] = jnp.full(m_ref.shape, -1e30, jnp.float32)
        l_ref[...] = jnp.zeros_like(l_ref)
        acc_ref[...] = jnp.zeros_like(acc_ref)

    # One bf16 MXU matmul covers the input projections of all TL timesteps of
    # this chunk and all three gates (PyTorch gate order r|z|n); f32 accumulate.
    # b_x already contains b_ir+b_hr | b_iz+b_hz | b_in.
    xp_ref[...] = (
        jnp.dot(emb_ref[...], w_i_ref[...], preferred_element_type=jnp.float32)
        + b_x_ref[...])

    feat_u = feat_u_ref[...]                  # (TB, D)  f32
    lens = lens_ref[...]                      # (TB, 1)  i32
    w_h = w_h_ref[...]                        # (D, 3D)  bf16
    b_h = b_h_ref[...]                        # (1, 3D)  f32 (n-gate bias only)
    t_base = t_blk * tl

    def step(tt, carry):
        h, m, l, acc = carry
        row0 = pl.multiple_of(tt * TB, 8)
        xp = xp_ref[pl.ds(row0, TB), :]                          # (TB, 3D) f32
        hp = jnp.dot(h.astype(jnp.bfloat16), w_h,
                     preferred_element_type=jnp.float32) + b_h   # (TB, 3D) f32
        r = jax.nn.sigmoid(xp[:, 0:D] + hp[:, 0:D])
        z = jax.nn.sigmoid(xp[:, D:2 * D] + hp[:, D:2 * D])
        n = jnp.tanh(xp[:, 2 * D:] + r * hp[:, 2 * D:])
        h_new = n + z * (h - n)                                  # (1-z)*n + z*h

        valid = (t_base + tt) < lens                             # (TB, 1) bool
        h = jnp.where(valid, h_new, h)                           # pack_padded: freeze h

        # Online masked softmax over score_t = <h_t, e_u>; this path stays f32
        # (the -1e30 sentinel does not fit bf16).  Padded steps get exp -> 0.
        score = jnp.sum(h_new * feat_u, axis=-1, keepdims=True)  # (TB, 1)
        score = jnp.where(valid, score, -1e30)
        m_new = jnp.maximum(m, score)
        corr = jnp.exp(m - m_new)
        p = jnp.exp(score - m_new)
        l = corr * l + p
        acc = corr * acc + p * h_new
        return h, m_new, l, acc

    carry = (h_ref[...], m_ref[...], l_ref[...], acc_ref[...])
    h, m, l, acc = lax.fori_loop(0, tl, step, carry, unroll=True)
    h_ref[...] = h
    m_ref[...] = m
    l_ref[...] = l
    acc_ref[...] = acc

    # NOTE: sessions with lens == 0 degenerate to a uniform softmax over the
    # (frozen) candidate states (finite, never NaN); such rows are padding and
    # are sliced off by the wrapper.
    @pl.when(t_blk == n_blk - 1)
    def _():
        c_global = acc / l                                       # (TB, D)
        sr_ref[...] = w_combine * h + (1.0 - w_combine) * c_global


# ---------------------------------------------------------------------------
# Kernel 2: logits tile = sr_bf16 @ item_tile_bf16 (renorm pre-folded)
# ---------------------------------------------------------------------------
def _ssrm_logits_kernel(sr_ref, item_t_ref, out_ref):
    out_ref[...] = jnp.dot(sr_ref[...], item_t_ref[...],
                           preferred_element_type=jnp.float32)


# ---------------------------------------------------------------------------
# Wrapper
# ---------------------------------------------------------------------------
def _renorm_rows(x, max_norm=1.0, eps=1e-7):
    # PyTorch nn.Embedding(max_norm=1): scale ONLY rows whose norm exceeds
    # max_norm, by max_norm / (norm + eps).
    norms = jnp.sqrt(jnp.sum(x * x, axis=-1, keepdims=True))
    scale = jnp.where(norms > max_norm, max_norm / (norms + eps), 1.0)
    return x * scale


def ssrm_forward(uids, padded_seqs, lens, params, *, w=0.5,
                 tl=16, tb=128, tn=4096):
    num_items, D = params["item_emb"].shape
    B, L = padded_seqs.shape
    D3 = 3 * D

    # ---- embedding lookups (+ max_norm renorm of the gathered rows only) ----
    feat_u = _renorm_rows(params["user_emb"][uids].astype(jnp.float32))
    emb_seqs = _renorm_rows(params["item_emb"][padded_seqs].astype(jnp.float32))

    # ---- batch / time tiling ----
    TB = min(tb, _round_up(max(B, 8), 8))        # batch block (multiple of 8)
    B_pad = _round_up(max(B, 8), TB)
    nb = B_pad // TB
    TL = min(tl, L)                              # timesteps per grid step
    L_pad = _round_up(L, TL)
    nt = L_pad // TL

    pad_b = B_pad - B
    feat_u = jnp.pad(feat_u, ((0, pad_b), (0, 0)))
    lens_p = jnp.pad(lens.astype(jnp.int32), (0, pad_b)).reshape(B_pad, 1)

    # Per-batch-block time-major layout (nb, L_pad*TB, D): row = t*TB + b.
    # Lets the emb chunk BlockSpec feed one (TL*TB, D) bf16 matmul per chunk
    # with contiguous per-timestep slices of the projection.
    emb_p = jnp.pad(emb_seqs.astype(jnp.bfloat16),
                    ((0, pad_b), (0, L_pad - L), (0, 0)))        # (B_pad, L_pad, D)
    emb3 = (emb_p.reshape(nb, TB, L_pad, D)
            .transpose(0, 2, 1, 3)
            .reshape(nb, L_pad * TB, D))

    # ---- fused GRU gate weights (gate order r|z|n), bf16 for the MXU ----
    w_i_cat = params["w_ih"].T.astype(jnp.bfloat16)              # (D, 3D)
    w_h_cat = params["w_hh"].T.astype(jnp.bfloat16)              # (D, 3D)
    b_ih = params["b_ih"].astype(jnp.float32).reshape(3, D)
    b_hh = params["b_hh"].astype(jnp.float32).reshape(3, D)
    b_x = jnp.concatenate([b_ih[0] + b_hh[0], b_ih[1] + b_hh[1],
                           b_ih[2]]).reshape(1, D3)
    b_h = jnp.concatenate([jnp.zeros((2 * D,), jnp.float32),
                           b_hh[2]]).reshape(1, D3)

    # Explicit scoped-VMEM budget: chunk working set with generous headroom.
    vmem1 = 2 * (2 * TL * TB * D * 2        # emb chunk, double-buffered bf16
                 + TL * TB * D3 * 4         # xp scratch (f32)
                 + 4 * TB * D * 4           # h/acc scratch + feat_u + sr
                 + 2 * D * D3 * 2           # w_ih + w_hh (bf16)
                 + 3 * TB * 128 * 4) + (8 << 20)

    sr = pl.pallas_call(
        functools.partial(_ssrm_sr_kernel, w_combine=float(w), tl=TL),
        out_shape=jax.ShapeDtypeStruct((B_pad, D), jnp.float32),
        grid=(nb, nt),
        in_specs=[
            pl.BlockSpec((None, TL * TB, D), lambda b, t: (b, t, 0)),  # emb chunk
            pl.BlockSpec((TB, D), lambda b, t: (b, 0)),                # feat_u
            pl.BlockSpec((TB, 1), lambda b, t: (b, 0)),                # lens
            pl.BlockSpec((D, D3), lambda b, t: (0, 0)),                # w_ih^T
            pl.BlockSpec((D, D3), lambda b, t: (0, 0)),                # w_hh^T
            pl.BlockSpec((1, D3), lambda b, t: (0, 0)),                # b_x
            pl.BlockSpec((1, D3), lambda b, t: (0, 0)),                # b_h
        ],
        out_specs=pl.BlockSpec((TB, D), lambda b, t: (b, 0)),
        scratch_shapes=[
            pltpu.VMEM((TL * TB, D3), jnp.float32),   # xp (chunk projections)
            pltpu.VMEM((TB, D), jnp.float32),         # h
            pltpu.VMEM((TB, 1), jnp.float32),         # m (online-softmax max)
            pltpu.VMEM((TB, 1), jnp.float32),         # l (online-softmax denom)
            pltpu.VMEM((TB, D), jnp.float32),         # acc (weighted sum)
        ],
        compiler_params=pltpu.CompilerParams(
            dimension_semantics=("parallel", "arbitrary"),
            vmem_limit_bytes=int(vmem1)),
    )(emb3, feat_u, lens_p, w_i_cat, w_h_cat, b_x, b_h)

    # ---- kernel 2: logits = sr @ renorm(item_emb).T, streamed over items ----
    # The reference scores against item_embedding(indices) (every row looked
    # up), so the max_norm renorm applies to ALL rows; fold it into the same
    # single wrapper pass that builds the transposed bf16 table.
    item = params["item_emb"].astype(jnp.float32)
    norms = jnp.sqrt(jnp.sum(item * item, axis=-1, keepdims=True))
    scale = jnp.where(norms > 1.0, 1.0 / (norms + 1e-7), 1.0)
    item_t = (item * scale).T.astype(jnp.bfloat16)               # (D, N)

    n_pad128 = _round_up(num_items, 128)
    tn_eff = min(tn, n_pad128)                                   # multiple of 128
    n_pad = _round_up(n_pad128, tn_eff)
    item_t = jnp.pad(item_t, ((0, 0), (0, n_pad - num_items)))
    sr_bf16 = sr.astype(jnp.bfloat16)

    vmem2 = 2 * (2 * D * tn_eff * 2          # item tile, double-buffered bf16
                 + 2 * B_pad * tn_eff * 4    # out tile, double-buffered f32
                 + B_pad * D * 2) + (8 << 20)

    logits = pl.pallas_call(
        _ssrm_logits_kernel,
        out_shape=jax.ShapeDtypeStruct((B_pad, n_pad), jnp.float32),
        grid=(n_pad // tn_eff,),
        in_specs=[pl.BlockSpec((B_pad, D), lambda j: (0, 0)),
                  pl.BlockSpec((D, tn_eff), lambda j: (0, j))],
        out_specs=pl.BlockSpec((B_pad, tn_eff), lambda j: (0, j)),
        compiler_params=pltpu.CompilerParams(
            dimension_semantics=("parallel",),
            vmem_limit_bytes=int(vmem2)),
    )(sr_bf16, item_t)

    return logits[:B, :num_items]


# ---------------------------------------------------------------------------
# Deterministic parameter init (shapes follow the PyTorch module)
# ---------------------------------------------------------------------------
def init_params(key, num_users, num_items, embedding_dim):
    k = jax.random.split(key, 6)
    D = embedding_dim
    bound = 1.0 / jnp.sqrt(jnp.float32(D))
    return {
        "user_emb": jax.random.normal(k[0], (num_users, D), jnp.float32),
        "item_emb": jax.random.normal(k[1], (num_items, D), jnp.float32),
        # nn.GRU(D, D): weight_ih_l0 (3D, D), weight_hh_l0 (3D, D), biases (3D,)
        "w_ih": jax.random.uniform(k[2], (3 * D, D), jnp.float32, -bound, bound),
        "w_hh": jax.random.uniform(k[3], (3 * D, D), jnp.float32, -bound, bound),
        "b_ih": jax.random.uniform(k[4], (3 * D,), jnp.float32, -bound, bound),
        "b_hh": jax.random.uniform(k[5], (3 * D,), jnp.float32, -bound, bound),
    }


if __name__ == "__main__":
    num_users, num_items, embedding_dim = 8, 64, 32
    B, L = 2, 8

    key = jax.random.PRNGKey(0)
    pkey, dkey1, _ = jax.random.split(key, 3)
    params = init_params(pkey, num_users, num_items, embedding_dim)

    uids = jnp.array([1, 5], dtype=jnp.int32)
    padded_seqs = jax.random.randint(dkey1, (B, L), 0, num_items, jnp.int32)
    lens = jnp.array([8, 5], dtype=jnp.int32)
    pad_mask = jax.lax.broadcasted_iota(jnp.int32, (B, L), 1) < lens[:, None]
    padded_seqs = jnp.where(pad_mask, padded_seqs, 0)

    logits = ssrm_forward(uids, padded_seqs, lens, params, w=0.5)
    jax.block_until_ready(logits)
    assert logits.shape == (B, num_items)
    assert bool(jnp.all(jnp.isfinite(logits)))
    print("KERNEL_OK")
</pallas_src>

<mosaic_0001>
module attributes {stable_mosaic.version = 11 : i64} {
  func.func @_ssrm_sr_kernel(%arg0: i32, %arg1: i32, %arg2: memref<1x64x32xbf16, #tpu.memory_space<vmem>>, %arg3: memref<8x32xf32, #tpu.memory_space<vmem>>, %arg4: memref<8x1xi32, #tpu.memory_space<vmem>>, %arg5: memref<32x96xbf16, #tpu.memory_space<vmem>>, %arg6: memref<32x96xbf16, #tpu.memory_space<vmem>>, %arg7: memref<1x96xf32, #tpu.memory_space<vmem>>, %arg8: memref<1x96xf32, #tpu.memory_space<vmem>>, %arg9: memref<8x32xf32, #tpu.memory_space<vmem>>, %arg10: memref<64x96xf32, #tpu.memory_space<vmem>>, %arg11: memref<8x32xf32, #tpu.memory_space<vmem>>, %arg12: memref<8x1xf32, #tpu.memory_space<vmem>>, %arg13: memref<8x1xf32, #tpu.memory_space<vmem>>, %arg14: memref<8x32xf32, #tpu.memory_space<vmem>>) attributes {dimension_semantics = [#tpu.dimension_semantics<parallel>, #tpu.dimension_semantics<arbitrary>], iteration_bounds = array<i64: 1, 1>, scalar_prefetch = 0 : i64, scratch_operands = 5 : i64, tpu.core_type = #tpu.core_type<tc>, window_params = [{transform_indices = @transform_0, window_bounds = array<i64: 1, 64, 32>}, {transform_indices = @transform_1, window_bounds = array<i64: 8, 32>}, {transform_indices = @transform_2, window_bounds = array<i64: 8, 1>}, {pipeline_mode = #tpu.pipeline_mode<synchronous>, transform_indices = @transform_3, window_bounds = array<i64: 32, 96>}, {pipeline_mode = #tpu.pipeline_mode<synchronous>, transform_indices = @transform_4, window_bounds = array<i64: 32, 96>}, {pipeline_mode = #tpu.pipeline_mode<synchronous>, transform_indices = @transform_5, window_bounds = array<i64: 1, 96>}, {pipeline_mode = #tpu.pipeline_mode<synchronous>, transform_indices = @transform_6, window_bounds = array<i64: 1, 96>}, {transform_indices = @transform_7, window_bounds = array<i64: 8, 32>}]} {
    %c0_i32 = arith.constant 0 : i32
    %0 = arith.cmpi eq, %arg1, %c0_i32 : i32
    %1 = arith.extui %0 : i1 to i32
    %c0_i32_0 = arith.constant 0 : i32
    %2 = arith.cmpi ne, %1, %c0_i32_0 : i32
    scf.if %2 {
      %cst_93 = arith.constant 0.000000e+00 : f32
      %467 = vector.broadcast %cst_93 : f32 to vector<8x32xf32>
      %c0_94 = arith.constant 0 : index
      %c0_95 = arith.constant 0 : index
      %468 = vector.load %arg11[%c0_94, %c0_95] : memref<8x32xf32, #tpu.memory_space<vmem>>, vector<8x32xf32>
      tpu.vector_store %arg11[%c0_94, %c0_95], %467 {strides = array<i32>} : memref<8x32xf32, #tpu.memory_space<vmem>>, vector<8x32xf32>,
      %cst_96 = arith.constant -1.000000e+30 : f32
      %469 = vector.broadcast %cst_96 : f32 to vector<8x1xf32>
      %c0_97 = arith.constant 0 : index
      %c0_98 = arith.constant 0 : index
      %470 = vector.load %arg12[%c0_97, %c0_98] : memref<8x1xf32, #tpu.memory_space<vmem>>, vector<8x1xf32>
      tpu.vector_store %arg12[%c0_97, %c0_98], %469 {strides = array<i32>} : memref<8x1xf32, #tpu.memory_space<vmem>>, vector<8x1xf32>,
      %cst_99 = arith.constant 0.000000e+00 : f32
      %471 = vector.broadcast %cst_99 : f32 to vector<8x1xf32>
      %c0_100 = arith.constant 0 : index
      %c0_101 = arith.constant 0 : index
      %472 = vector.load %arg13[%c0_100, %c0_101] : memref<8x1xf32, #tpu.memory_space<vmem>>, vector<8x1xf32>
      tpu.vector_store %arg13[%c0_100, %c0_101], %471 {strides = array<i32>} : memref<8x1xf32, #tpu.memory_space<vmem>>, vector<8x1xf32>,
      %cst_102 = arith.constant 0.000000e+00 : f32
      %473 = vector.broadcast %cst_102 : f32 to vector<8x32xf32>
      %c0_103 = arith.constant 0 : index
      %c0_104 = arith.constant 0 : index
      %474 = vector.load %arg14[%c0_103, %c0_104] : memref<8x32xf32, #tpu.memory_space<vmem>>, vector<8x32xf32>
      tpu.vector_store %arg14[%c0_103, %c0_104], %473 {strides = array<i32>} : memref<8x32xf32, #tpu.memory_space<vmem>>, vector<8x32xf32>,
    } else {
    }
    %c0 = arith.constant 0 : index
    %c0_1 = arith.constant 0 : index
    %c0_2 = arith.constant 0 : index
    %3 = vector.load %arg2[%c0, %c0_1, %c0_2] : memref<1x64x32xbf16, #tpu.memory_space<vmem>>, vector<1x64x32xbf16>
    %4 = vector.shape_cast %3 : vector<1x64x32xbf16> to vector<64x32xbf16>
    %c0_3 = arith.constant 0 : index
    %c0_4 = arith.constant 0 : index
    %5 = vector.load %arg5[%c0_3, %c0_4] : memref<32x96xbf16, #tpu.memory_space<vmem>>, vector<32x96xbf16>
    %cst = arith.constant dense<0.000000e+00> : vector<64x96xf32>
    %6 = tpu.matmul %4, %5, %cst {dimension_numbers = #tpu.dot_dimension_numbers<[1], [0], [0], [1], [0, 0, 1, 1], [], []>} : vector<64x32xbf16>, vector<32x96xbf16>, vector<64x96xf32> -> vector<64x96xf32>
    %c0_5 = arith.constant 0 : index
    %c0_6 = arith.constant 0 : index
    %7 = vector.load %arg7[%c0_5, %c0_6] : memref<1x96xf32, #tpu.memory_space<vmem>>, vector<1x96xf32>
    %8 = vector.broadcast %7 : vector<1x96xf32> to vector<64x96xf32>
    %9 = arith.addf %6, %8 : vector<64x96xf32>
    %c0_7 = arith.constant 0 : index
    %c0_8 = arith.constant 0 : index
    %10 = vector.load %arg10[%c0_7, %c0_8] : memref<64x96xf32, #tpu.memory_space<vmem>>, vector<64x96xf32>
    tpu.vector_store %arg10[%c0_7, %c0_8], %9 {strides = array<i32>} : memref<64x96xf32, #tpu.memory_space<vmem>>, vector<64x96xf32>,
    %c0_9 = arith.constant 0 : index
    %c0_10 = arith.constant 0 : index
    %11 = vector.load %arg3[%c0_9, %c0_10] : memref<8x32xf32, #tpu.memory_space<vmem>>, vector<8x32xf32>
    %c0_11 = arith.constant 0 : index
    %c0_12 = arith.constant 0 : index
    %12 = vector.load %arg4[%c0_11, %c0_12] : memref<8x1xi32, #tpu.memory_space<vmem>>, vector<8x1xi32>
    %c0_13 = arith.constant 0 : index
    %c0_14 = arith.constant 0 : index
    %13 = vector.load %arg6[%c0_13, %c0_14] : memref<32x96xbf16, #tpu.memory_space<vmem>>, vector<32x96xbf16>
    %c0_15 = arith.constant 0 : index
    %c0_16 = arith.constant 0 : index
    %14 = vector.load %arg8[%c0_15, %c0_16] : memref<1x96xf32, #tpu.memory_space<vmem>>, vector<1x96xf32>
    %c8_i32 = arith.constant 8 : i32
    %15 = arith.muli %arg1, %c8_i32 : i32
    %c0_17 = arith.constant 0 : index
    %c0_18 = arith.constant 0 : index
    %16 = vector.load %arg11[%c0_17, %c0_18] : memref<8x32xf32, #tpu.memory_space<vmem>>, vector<8x32xf32>
    %c0_19 = arith.constant 0 : index
    %c0_20 = arith.constant 0 : index
    %17 = vector.load %arg12[%c0_19, %c0_20] : memref<8x1xf32, #tpu.memory_space<vmem>>, vector<8x1xf32>
    %c0_21 = arith.constant 0 : index
    %c0_22 = arith.constant 0 : index
    %18 = vector.load %arg13[%c0_21, %c0_22] : memref<8x1xf32, #tpu.memory_space<vmem>>, vector<8x1xf32>
    %c0_23 = arith.constant 0 : index
    %c0_24 = arith.constant 0 : index
    %19 = vector.load %arg14[%c0_23, %c0_24] : memref<8x32xf32, #tpu.memory_space<vmem>>, vector<8x32xf32>
    %c0_i32_25 = arith.constant 0 : i32
    %c8_i32_26 = arith.constant 8 : i32
    %20 = arith.muli %c0_i32_25, %c8_i32_26 : i32
    %21 = tpu.assume_multiple %20, 8 : i32
    %22 = arith.index_cast %21 : i32 to index
    %c0_27 = arith.constant 0 : index
    %23 = vector.load %arg10[%22, %c0_27] : memref<64x96xf32, #tpu.memory_space<vmem>>, vector<8x96xf32>
    %24 = arith.truncf %16 : vector<8x32xf32> to vector<8x32xbf16>
    %cst_28 = arith.constant dense<0.000000e+00> : vector<8x96xf32>
    %25 = tpu.matmul %24, %13, %cst_28 {dimension_numbers = #tpu.dot_dimension_numbers<[1], [0], [0], [1], [0, 0, 1, 1], [], []>} : vector<8x32xbf16>, vector<32x96xbf16>, vector<8x96xf32> -> vector<8x96xf32>
    %26 = vector.broadcast %14 : vector<1x96xf32> to vector<8x96xf32>
    %27 = arith.addf %25, %26 : vector<8x96xf32>
    %28 = vector.extract_strided_slice %23 {offsets = [0, 0], sizes = [8, 32], strides = [1, 1]} : vector<8x96xf32> to vector<8x32xf32>
    %29 = vector.extract_strided_slice %27 {offsets = [0, 0], sizes = [8, 32], strides = [1, 1]} : vector<8x96xf32> to vector<8x32xf32>
    %30 = arith.addf %28, %29 : vector<8x32xf32>
    %31 = arith.negf %30 : vector<8x32xf32>
    %32 = math.exp %31 : vector<8x32xf32>
    %cst_29 = arith.constant 1.000000e+00 : f32
    %33 = vector.broadcast %cst_29 : f32 to vector<8x32xf32>
    %34 = arith.addf %33, %32 : vector<8x32xf32>
    %35 = arith.divf %33, %34 : vector<8x32xf32>
    %36 = vector.extract_strided_slice %23 {offsets = [0, 32], sizes = [8, 32], strides = [1, 1]} : vector<8x96xf32> to vector<8x32xf32>
    %37 = vector.extract_strided_slice %27 {offsets = [0, 32], sizes = [8, 32], strides = [1, 1]} : vector<8x96xf32> to vector<8x32xf32>
    %38 = arith.addf %36, %37 : vector<8x32xf32>
    %39 = arith.negf %38 : vector<8x32xf32>
    %40 = math.exp %39 : vector<8x32xf32>
    %cst_30 = arith.constant 1.000000e+00 : f32
    %41 = vector.broadcast %cst_30 : f32 to vector<8x32xf32>
    %42 = arith.addf %41, %40 : vector<8x32xf32>
    %43 = arith.divf %41, %42 : vector<8x32xf32>
    %44 = vector.extract_strided_slice %23 {offsets = [0, 64], sizes = [8, 32], strides = [1, 1]} : vector<8x96xf32> to vector<8x32xf32>
    %45 = vector.extract_strided_slice %27 {offsets = [0, 64], sizes = [8, 32], strides = [1, 1]} : vector<8x96xf32> to vector<8x32xf32>
    %46 = arith.mulf %35, %45 : vector<8x32xf32>
    %47 = arith.addf %44, %46 : vector<8x32xf32>
    %48 = math.tanh %47 : vector<8x32xf32>
    %49 = arith.subf %16, %48 : vector<8x32xf32>
    %50 = arith.mulf %43, %49 : vector<8x32xf32>
    %51 = arith.addf %48, %50 : vector<8x32xf32>
    %52 = arith.addi %15, %c0_i32_25 : i32
    %53 = vector.broadcast %52 : i32 to vector<8x1xi32>
    %54 = arith.cmpi slt, %53, %12 : vector<8x1xi32>
    %55 = vector.shape_cast %54 : vector<8x1xi1> to vector<8x1xi1>
    %56 = vector.broadcast %55 : vector<8x1xi1> to vector<8x32xi1>
    %57 = arith.select %56, %51, %16 : vector<8x32xi1>, vector<8x32xf32>
    %58 = arith.mulf %51, %11 : vector<8x32xf32>
    %cst_31 = arith.constant dense<0.000000e+00> : vector<8xf32>
    %59 = vector.multi_reduction <add>, %58, %cst_31 [1] : vector<8x32xf32> to vector<8xf32>
    %60 = vector.shape_cast %59 : vector<8xf32> to vector<8x1xf32>
    %cst_32 = arith.constant -1.000000e+30 : f32
    %61 = vector.broadcast %cst_32 : f32 to vector<8x1xf32>
    %62 = arith.select %54, %60, %61 : vector<8x1xi1>, vector<8x1xf32>
    %63 = arith.maximumf %17, %62 : vector<8x1xf32>
    %64 = arith.subf %17, %63 : vector<8x1xf32>
    %65 = math.exp %64 : vector<8x1xf32>
    %66 = arith.subf %62, %63 : vector<8x1xf32>
    %67 = math.exp %66 : vector<8x1xf32>
    %68 = arith.mulf %65, %18 : vector<8x1xf32>
    %69 = arith.addf %68, %67 : vector<8x1xf32>
    %70 = vector.broadcast %65 : vector<8x1xf32> to vector<8x32xf32>
    %71 = arith.mulf %70, %19 : vector<8x32xf32>
    %72 = vector.broadcast %67 : vector<8x1xf32> to vector<8x32xf32>
    %73 = arith.mulf %72, %51 : vector<8x32xf32>
    %74 = arith.addf %71, %73 : vector<8x32xf32>
    %c1_i32 = arith.constant 1 : i32
    %c8_i32_33 = arith.constant 8 : i32
    %75 = arith.muli %c1_i32, %c8_i32_33 : i32
    %76 = tpu.assume_multiple %75, 8 : i32
    %77 = arith.index_cast %76 : i32 to index
    %c0_34 = arith.constant 0 : index
    %78 = vector.load %arg10[%77, %c0_34] : memref<64x96xf32, #tpu.memory_space<vmem>>, vector<8x96xf32>
    %79 = arith.truncf %57 : vector<8x32xf32> to vector<8x32xbf16>
    %cst_35 = arith.constant dense<0.000000e+00> : vector<8x96xf32>
    %80 = tpu.matmul %79, %13, %cst_35 {dimension_numbers = #tpu.dot_dimension_numbers<[1], [0], [0], [1], [0, 0, 1, 1], [], []>} : vector<8x32xbf16>, vector<32x96xbf16>, vector<8x96xf32> -> vector<8x96xf32>
    %81 = vector.broadcast %14 : vector<1x96xf32> to vector<8x96xf32>
    %82 = arith.addf %80, %81 : vector<8x96xf32>
    %83 = vector.extract_strided_slice %78 {offsets = [0, 0], sizes = [8, 32], strides = [1, 1]} : vector<8x96xf32> to vector<8x32xf32>
    %84 = vector.extract_strided_slice %82 {offsets = [0, 0], sizes = [8, 32], strides = [1, 1]} : vector<8x96xf32> to vector<8x32xf32>
    %85 = arith.addf %83, %84 : vector<8x32xf32>
    %86 = arith.negf %85 : vector<8x32xf32>
    %87 = math.exp %86 : vector<8x32xf32>
    %cst_36 = arith.constant 1.000000e+00 : f32
    %88 = vector.broadcast %cst_36 : f32 to vector<8x32xf32>
    %89 = arith.addf %88, %87 : vector<8x32xf32>
    %90 = arith.divf %88, %89 : vector<8x32xf32>
    %91 = vector.extract_strided_slice %78 {offsets = [0, 32], sizes = [8, 32], strides = [1, 1]} : vector<8x96xf32> to vector<8x32xf32>
    %92 = vector.extract_strided_slice %82 {offsets = [0, 32], sizes = [8, 32], strides = [1, 1]} : vector<8x96xf32> to vector<8x32xf32>
    %93 = arith.addf %91, %92 : vector<8x32xf32>
    %94 = arith.negf %93 : vector<8x32xf32>
    %95 = math.exp %94 : vector<8x32xf32>
    %cst_37 = arith.constant 1.000000e+00 : f32
    %96 = vector.broadcast %cst_37 : f32 to vector<8x32xf32>
    %97 = arith.addf %96, %95 : vector<8x32xf32>
    %98 = arith.divf %96, %97 : vector<8x32xf32>
    %99 = vector.extract_strided_slice %78 {offsets = [0, 64], sizes = [8, 32], strides = [1, 1]} : vector<8x96xf32> to vector<8x32xf32>
    %100 = vector.extract_strided_slice %82 {offsets = [0, 64], sizes = [8, 32], strides = [1, 1]} : vector<8x96xf32> to vector<8x32xf32>
    %101 = arith.mulf %90, %100 : vector<8x32xf32>
    %102 = arith.addf %99, %101 : vector<8x32xf32>
    %103 = math.tanh %102 : vector<8x32xf32>
    %104 = arith.subf %57, %103 : vector<8x32xf32>
    %105 = arith.mulf %98, %104 : vector<8x32xf32>
    %106 = arith.addf %103, %105 : vector<8x32xf32>
    %107 = arith.addi %15, %c1_i32 : i32
    %108 = vector.broadcast %107 : i32 to vector<8x1xi32>
    %109 = arith.cmpi slt, %108, %12 : vector<8x1xi32>
    %110 = vector.shape_cast %109 : vector<8x1xi1> to vector<8x1xi1>
    %111 = vector.broadcast %110 : vector<8x1xi1> to vector<8x32xi1>
    %112 = arith.select %111, %106, %57 : vector<8x32xi1>, vector<8x32xf32>
    %113 = arith.mulf %106, %11 : vector<8x32xf32>
    %cst_38 = arith.constant dense<0.000000e+00> : vector<8xf32>
    %114 = vector.multi_reduction <add>, %113, %cst_38 [1] : vector<8x32xf32> to vector<8xf32>
    %115 = vector.shape_cast %114 : vector<8xf32> to vector<8x1xf32>
    %cst_39 = arith.constant -1.000000e+30 : f32
    %116 = vector.broadcast %cst_39 : f32 to vector<8x1xf32>
    %117 = arith.select %109, %115, %116 : vector<8x1xi1>, vector<8x1xf32>
    %118 = arith.maximumf %63, %117 : vector<8x1xf32>
    %119 = arith.subf %63, %118 : vector<8x1xf32>
    %120 = math.exp %119 : vector<8x1xf32>
    %121 = arith.subf %117, %118 : vector<8x1xf32>
    %122 = math.exp %121 : vector<8x1xf32>
    %123 = arith.mulf %120, %69 : vector<8x1xf32>
    %124 = arith.addf %123, %122 : vector<8x1xf32>
    %125 = vector.broadcast %120 : vector<8x1xf32> to vector<8x32xf32>
    %126 = arith.mulf %125, %74 : vector<8x32xf32>
    %127 = vector.broadcast %122 : vector<8x1xf32> to vector<8x32xf32>
    %128 = arith.mulf %127, %106 : vector<8x32xf32>
    %129 = arith.addf %126, %128 : vector<8x32xf32>
    %c2_i32 = arith.constant 2 : i32
    %c8_i32_40 = arith.constant 8 : i32
    %130 = arith.muli %c2_i32, %c8_i32_40 : i32
    %131 = tpu.assume_multiple %130, 8 : i32
    %132 = arith.index_cast %131 : i32 to index
    %c0_41 = arith.constant 0 : index
    %133 = vector.load %arg10[%132, %c0_41] : memref<64x96xf32, #tpu.memory_space<vmem>>, vector<8x96xf32>
    %134 = arith.truncf %112 : vector<8x32xf32> to vector<8x32xbf16>
    %cst_42 = arith.constant dense<0.000000e+00> : vector<8x96xf32>
    %135 = tpu.matmul %134, %13, %cst_42 {dimension_numbers = #tpu.dot_dimension_numbers<[1], [0], [0], [1], [0, 0, 1, 1], [], []>} : vector<8x32xbf16>, vector<32x96xbf16>, vector<8x96xf32> -> vector<8x96xf32>
    %136 = vector.broadcast %14 : vector<1x96xf32> to vector<8x96xf32>
    %137 = arith.addf %135, %136 : vector<8x96xf32>
    %138 = vector.extract_strided_slice %133 {offsets = [0, 0], sizes = [8, 32], strides = [1, 1]} : vector<8x96xf32> to vector<8x32xf32>
    %139 = vector.extract_strided_slice %137 {offsets = [0, 0], sizes = [8, 32], strides = [1, 1]} : vector<8x96xf32> to vector<8x32xf32>
    %140 = arith.addf %138, %139 : vector<8x32xf32>
    %141 = arith.negf %140 : vector<8x32xf32>
    %142 = math.exp %141 : vector<8x32xf32>
    %cst_43 = arith.constant 1.000000e+00 : f32
    %143 = vector.broadcast %cst_43 : f32 to vector<8x32xf32>
    %144 = arith.addf %143, %142 : vector<8x32xf32>
    %145 = arith.divf %143, %144 : vector<8x32xf32>
    %146 = vector.extract_strided_slice %133 {offsets = [0, 32], sizes = [8, 32], strides = [1, 1]} : vector<8x96xf32> to vector<8x32xf32>
    %147 = vector.extract_strided_slice %137 {offsets = [0, 32], sizes = [8, 32], strides = [1, 1]} : vector<8x96xf32> to vector<8x32xf32>
    %148 = arith.addf %146, %147 : vector<8x32xf32>
    %149 = arith.negf %148 : vector<8x32xf32>
    %150 = math.exp %149 : vector<8x32xf32>
    %cst_44 = arith.constant 1.000000e+00 : f32
    %151 = vector.broadcast %cst_44 : f32 to vector<8x32xf32>
    %152 = arith.addf %151, %150 : vector<8x32xf32>
    %153 = arith.divf %151, %152 : vector<8x32xf32>
    %154 = vector.extract_strided_slice %133 {offsets = [0, 64], sizes = [8, 32], strides = [1, 1]} : vector<8x96xf32> to vector<8x32xf32>
    %155 = vector.extract_strided_slice %137 {offsets = [0, 64], sizes = [8, 32], strides = [1, 1]} : vector<8x96xf32> to vector<8x32xf32>
    %156 = arith.mulf %145, %155 : vector<8x32xf32>
    %157 = arith.addf %154, %156 : vector<8x32xf32>
    %158 = math.tanh %157 : vector<8x32xf32>
    %159 = arith.subf %112, %158 : vector<8x32xf32>
    %160 = arith.mulf %153, %159 : vector<8x32xf32>
    %161 = arith.addf %158, %160 : vector<8x32xf32>
    %162 = arith.addi %15, %c2_i32 : i32
    %163 = vector.broadcast %162 : i32 to vector<8x1xi32>
    %164 = arith.cmpi slt, %163, %12 : vector<8x1xi32>
    %165 = vector.shape_cast %164 : vector<8x1xi1> to vector<8x1xi1>
    %166 = vector.broadcast %165 : vector<8x1xi1> to vector<8x32xi1>
    %167 = arith.select %166, %161, %112 : vector<8x32xi1>, vector<8x32xf32>
    %168 = arith.mulf %161, %11 : vector<8x32xf32>
    %cst_45 = arith.constant dense<0.000000e+00> : vector<8xf32>
    %169 = vector.multi_reduction <add>, %168, %cst_45 [1] : vector<8x32xf32> to vector<8xf32>
    %170 = vector.shape_cast %169 : vector<8xf32> to vector<8x1xf32>
    %cst_46 = arith.constant -1.000000e+30 : f32
    %171 = vector.broadcast %cst_46 : f32 to vector<8x1xf32>
    %172 = arith.select %164, %170, %171 : vector<8x1xi1>, vector<8x1xf32>
    %173 = arith.maximumf %118, %172 : vector<8x1xf32>
    %174 = arith.subf %118, %173 : vector<8x1xf32>
    %175 = math.exp %174 : vector<8x1xf32>
    %176 = arith.subf %172, %173 : vector<8x1xf32>
    %177 = math.exp %176 : vector<8x1xf32>
    %178 = arith.mulf %175, %124 : vector<8x1xf32>
    %179 = arith.addf %178, %177 : vector<8x1xf32>
    %180 = vector.broadcast %175 : vector<8x1xf32> to vector<8x32xf32>
    %181 = arith.mulf %180, %129 : vector<8x32xf32>
    %182 = vector.broadcast %177 : vector<8x1xf32> to vector<8x32xf32>
    %183 = arith.mulf %182, %161 : vector<8x32xf32>
    %184 = arith.addf %181, %183 : vector<8x32xf32>
    %c3_i32 = arith.constant 3 : i32
    %c8_i32_47 = arith.constant 8 : i32
    %185 = arith.muli %c3_i32, %c8_i32_47 : i32
    %186 = tpu.assume_multiple %185, 8 : i32
    %187 = arith.index_cast %186 : i32 to index
    %c0_48 = arith.constant 0 : index
    %188 = vector.load %arg10[%187, %c0_48] : memref<64x96xf32, #tpu.memory_space<vmem>>, vector<8x96xf32>
    %189 = arith.truncf %167 : vector<8x32xf32> to vector<8x32xbf16>
    %cst_49 = arith.constant dense<0.000000e+00> : vector<8x96xf32>
    %190 = tpu.matmul %189, %13, %cst_49 {dimension_numbers = #tpu.dot_dimension_numbers<[1], [0], [0], [1], [0, 0, 1, 1], [], []>} : vector<8x32xbf16>, vector<32x96xbf16>, vector<8x96xf32> -> vector<8x96xf32>
    %191 = vector.broadcast %14 : vector<1x96xf32> to vector<8x96xf32>
    %192 = arith.addf %190, %191 : vector<8x96xf32>
    %193 = vector.extract_strided_slice %188 {offsets = [0, 0], sizes = [8, 32], strides = [1, 1]} : vector<8x96xf32> to vector<8x32xf32>
    %194 = vector.extract_strided_slice %192 {offsets = [0, 0], sizes = [8, 32], strides = [1, 1]} : vector<8x96xf32> to vector<8x32xf32>
    %195 = arith.addf %193, %194 : vector<8x32xf32>
    %196 = arith.negf %195 : vector<8x32xf32>
    %197 = math.exp %196 : vector<8x32xf32>
    %cst_50 = arith.constant 1.000000e+00 : f32
    %198 = vector.broadcast %cst_50 : f32 to vector<8x32xf32>
    %199 = arith.addf %198, %197 : vector<8x32xf32>
    %200 = arith.divf %198, %199 : vector<8x32xf32>
    %201 = vector.extract_strided_slice %188 {offsets = [0, 32], sizes = [8, 32], strides = [1, 1]} : vector<8x96xf32> to vector<8x32xf32>
    %202 = vector.extract_strided_slice %192 {offsets = [0, 32], sizes = [8, 32], strides = [1, 1]} : vector<8x96xf32> to vector<8x32xf32>
    %203 = arith.addf %201, %202 : vector<8x32xf32>
    %204 = arith.negf %203 : vector<8x32xf32>
    %205 = math.exp %204 : vector<8x32xf32>
    %cst_51 = arith.constant 1.000000e+00 : f32
    %206 = vector.broadcast %cst_51 : f32 to vector<8x32xf32>
    %207 = arith.addf %206, %205 : vector<8x32xf32>
    %208 = arith.divf %206, %207 : vector<8x32xf32>
    %209 = vector.extract_strided_slice %188 {offsets = [0, 64], sizes = [8, 32], strides = [1, 1]} : vector<8x96xf32> to vector<8x32xf32>
    %210 = vector.extract_strided_slice %192 {offsets = [0, 64], sizes = [8, 32], strides = [1, 1]} : vector<8x96xf32> to vector<8x32xf32>
    %211 = arith.mulf %200, %210 : vector<8x32xf32>
    %212 = arith.addf %209, %211 : vector<8x32xf32>
    %213 = math.tanh %212 : vector<8x32xf32>
    %214 = arith.subf %167, %213 : vector<8x32xf32>
    %215 = arith.mulf %208, %214 : vector<8x32xf32>
    %216 = arith.addf %213, %215 : vector<8x32xf32>
    %217 = arith.addi %15, %c3_i32 : i32
    %218 = vector.broadcast %217 : i32 to vector<8x1xi32>
    %219 = arith.cmpi slt, %218, %12 : vector<8x1xi32>
    %220 = vector.shape_cast %219 : vector<8x1xi1> to vector<8x1xi1>
    %221 = vector.broadcast %220 : vector<8x1xi1> to vector<8x32xi1>
    %222 = arith.select %221, %216, %167 : vector<8x32xi1>, vector<8x32xf32>
    %223 = arith.mulf %216, %11 : vector<8x32xf32>
    %cst_52 = arith.constant dense<0.000000e+00> : vector<8xf32>
    %224 = vector.multi_reduction <add>, %223, %cst_52 [1] : vector<8x32xf32> to vector<8xf32>
    %225 = vector.shape_cast %224 : vector<8xf32> to vector<8x1xf32>
    %cst_53 = arith.constant -1.000000e+30 : f32
    %226 = vector.broadcast %cst_53 : f32 to vector<8x1xf32>
    %227 = arith.select %219, %225, %226 : vector<8x1xi1>, vector<8x1xf32>
    %228 = arith.maximumf %173, %227 : vector<8x1xf32>
    %229 = arith.subf %173, %228 : vector<8x1xf32>
    %230 = math.exp %229 : vector<8x1xf32>
    %231 = arith.subf %227, %228 : vector<8x1xf32>
    %232 = math.exp %231 : vector<8x1xf32>
    %233 = arith.mulf %230, %179 : vector<8x1xf32>
    %234 = arith.addf %233, %232 : vector<8x1xf32>
    %235 = vector.broadcast %230 : vector<8x1xf32> to vector<8x32xf32>
    %236 = arith.mulf %235, %184 : vector<8x32xf32>
    %237 = vector.broadcast %232 : vector<8x1xf32> to vector<8x32xf32>
    %238 = arith.mulf %237, %216 : vector<8x32xf32>
    %239 = arith.addf %236, %238 : vector<8x32xf32>
    %c4_i32 = arith.constant 4 : i32
    %c8_i32_54 = arith.constant 8 : i32
    %240 = arith.muli %c4_i32, %c8_i32_54 : i32
    %241 = tpu.assume_multiple %240, 8 : i32
    %242 = arith.index_cast %241 : i32 to index
    %c0_55 = arith.constant 0 : index
    %243 = vector.load %arg10[%242, %c0_55] : memref<64x96xf32, #tpu.memory_space<vmem>>, vector<8x96xf32>
    %244 = arith.truncf %222 : vector<8x32xf32> to vector<8x32xbf16>
    %cst_56 = arith.constant dense<0.000000e+00> : vector<8x96xf32>
    %245 = tpu.matmul %244, %13, %cst_56 {dimension_numbers = #tpu.dot_dimension_numbers<[1], [0], [0], [1], [0, 0, 1, 1], [], []>} : vector<8x32xbf16>, vector<32x96xbf16>, vector<8x96xf32> -> vector<8x96xf32>
    %246 = vector.broadcast %14 : vector<1x96xf32> to vector<8x96xf32>
    %247 = arith.addf %245, %246 : vector<8x96xf32>
    %248 = vector.extract_strided_slice %243 {offsets = [0, 0], sizes = [8, 32], strides = [1, 1]} : vector<8x96xf32> to vector<8x32xf32>
    %249 = vector.extract_strided_slice %247 {offsets = [0, 0], sizes = [8, 32], strides = [1, 1]} : vector<8x96xf32> to vector<8x32xf32>
    %250 = arith.addf %248, %249 : vector<8x32xf32>
    %251 = arith.negf %250 : vector<8x32xf32>
    %252 = math.exp %251 : vector<8x32xf32>
    %cst_57 = arith.constant 1.000000e+00 : f32
    %253 = vector.broadcast %cst_57 : f32 to vector<8x32xf32>
    %254 = arith.addf %253, %252 : vector<8x32xf32>
    %255 = arith.divf %253, %254 : vector<8x32xf32>
    %256 = vector.extract_strided_slice %243 {offsets = [0, 32], sizes = [8, 32], strides = [1, 1]} : vector<8x96xf32> to vector<8x32xf32>
    %257 = vector.extract_strided_slice %247 {offsets = [0, 32], sizes = [8, 32], strides = [1, 1]} : vector<8x96xf32> to vector<8x32xf32>
    %258 = arith.addf %256, %257 : vector<8x32xf32>
    %259 = arith.negf %258 : vector<8x32xf32>
    %260 = math.exp %259 : vector<8x32xf32>
    %cst_58 = arith.constant 1.000000e+00 : f32
    %261 = vector.broadcast %cst_58 : f32 to vector<8x32xf32>
    %262 = arith.addf %261, %260 : vector<8x32xf32>
    %263 = arith.divf %261, %262 : vector<8x32xf32>
    %264 = vector.extract_strided_slice %243 {offsets = [0, 64], sizes = [8, 32], strides = [1, 1]} : vector<8x96xf32> to vector<8x32xf32>
    %265 = vector.extract_strided_slice %247 {offsets = [0, 64], sizes = [8, 32], strides = [1, 1]} : vector<8x96xf32> to vector<8x32xf32>
    %266 = arith.mulf %255, %265 : vector<8x32xf32>
    %267 = arith.addf %264, %266 : vector<8x32xf32>
    %268 = math.tanh %267 : vector<8x32xf32>
    %269 = arith.subf %222, %268 : vector<8x32xf32>
    %270 = arith.mulf %263, %269 : vector<8x32xf32>
    %271 = arith.addf %268, %270 : vector<8x32xf32>
    %272 = arith.addi %15, %c4_i32 : i32
    %273 = vector.broadcast %272 : i32 to vector<8x1xi32>
    %274 = arith.cmpi slt, %273, %12 : vector<8x1xi32>
    %275 = vector.shape_cast %274 : vector<8x1xi1> to vector<8x1xi1>
    %276 = vector.broadcast %275 : vector<8x1xi1> to vector<8x32xi1>
    %277 = arith.select %276, %271, %222 : vector<8x32xi1>, vector<8x32xf32>
    %278 = arith.mulf %271, %11 : vector<8x32xf32>
    %cst_59 = arith.constant dense<0.000000e+00> : vector<8xf32>
    %279 = vector.multi_reduction <add>, %278, %cst_59 [1] : vector<8x32xf32> to vector<8xf32>
    %280 = vector.shape_cast %279 : vector<8xf32> to vector<8x1xf32>
    %cst_60 = arith.constant -1.000000e+30 : f32
    %281 = vector.broadcast %cst_60 : f32 to vector<8x1xf32>
    %282 = arith.select %274, %280, %281 : vector<8x1xi1>, vector<8x1xf32>
    %283 = arith.maximumf %228, %282 : vector<8x1xf32>
    %284 = arith.subf %228, %283 : vector<8x1xf32>
    %285 = math.exp %284 : vector<8x1xf32>
    %286 = arith.subf %282, %283 : vector<8x1xf32>
    %287 = math.exp %286 : vector<8x1xf32>
    %288 = arith.mulf %285, %234 : vector<8x1xf32>
    %289 = arith.addf %288, %287 : vector<8x1xf32>
    %290 = vector.broadcast %285 : vector<8x1xf32> to vector<8x32xf32>
    %291 = arith.mulf %290, %239 : vector<8x32xf32>
    %292 = vector.broadcast %287 : vector<8x1xf32> to vector<8x32xf32>
    %293 = arith.mulf %292, %271 : vector<8x32xf32>
    %294 = arith.addf %291, %293 : vector<8x32xf32>
    %c5_i32 = arith.constant 5 : i32
    %c8_i32_61 = arith.constant 8 : i32
    %295 = arith.muli %c5_i32, %c8_i32_61 : i32
    %296 = tpu.assume_multiple %295, 8 : i32
    %297 = arith.index_cast %296 : i32 to index
    %c0_62 = arith.constant 0 : index
    %298 = vector.load %arg10[%297, %c0_62] : memref<64x96xf32, #tpu.memory_space<vmem>>, vector<8x96xf32>
    %299 = arith.truncf %277 : vector<8x32xf32> to vector<8x32xbf16>
    %cst_63 = arith.constant dense<0.000000e+00> : vector<8x96xf32>
    %300 = tpu.matmul %299, %13, %cst_63 {dimension_numbers = #tpu.dot_dimension_numbers<[1], [0], [0], [1], [0, 0, 1, 1], [], []>} : vector<8x32xbf16>, vector<32x96xbf16>, vector<8x96xf32> -> vector<8x96xf32>
    %301 = vector.broadcast %14 : vector<1x96xf32> to vector<8x96xf32>
    %302 = arith.addf %300, %301 : vector<8x96xf32>
    %303 = vector.extract_strided_slice %298 {offsets = [0, 0], sizes = [8, 32], strides = [1, 1]} : vector<8x96xf32> to vector<8x32xf32>
    %304 = vector.extract_strided_slice %302 {offsets = [0, 0], sizes = [8, 32], strides = [1, 1]} : vector<8x96xf32> to vector<8x32xf32>
    %305 = arith.addf %303, %304 : vector<8x32xf32>
    %306 = arith.negf %305 : vector<8x32xf32>
    %307 = math.exp %306 : vector<8x32xf32>
    %cst_64 = arith.constant 1.000000e+00 : f32
    %308 = vector.broadcast %cst_64 : f32 to vector<8x32xf32>
    %309 = arith.addf %308, %307 : vector<8x32xf32>
    %310 = arith.divf %308, %309 : vector<8x32xf32>
    %311 = vector.extract_strided_slice %298 {offsets = [0, 32], sizes = [8, 32], strides = [1, 1]} : vector<8x96xf32> to vector<8x32xf32>
    %312 = vector.extract_strided_slice %302 {offsets = [0, 32], sizes = [8, 32], strides = [1, 1]} : vector<8x96xf32> to vector<8x32xf32>
    %313 = arith.addf %311, %312 : vector<8x32xf32>
    %314 = arith.negf %313 : vector<8x32xf32>
    %315 = math.exp %314 : vector<8x32xf32>
    %cst_65 = arith.constant 1.000000e+00 : f32
    %316 = vector.broadcast %cst_65 : f32 to vector<8x32xf32>
    %317 = arith.addf %316, %315 : vector<8x32xf32>
    %318 = arith.divf %316, %317 : vector<8x32xf32>
    %319 = vector.extract_strided_slice %298 {offsets = [0, 64], sizes = [8, 32], strides = [1, 1]} : vector<8x96xf32> to vector<8x32xf32>
    %320 = vector.extract_strided_slice %302 {offsets = [0, 64], sizes = [8, 32], strides = [1, 1]} : vector<8x96xf32> to vector<8x32xf32>
    %321 = arith.mulf %310, %320 : vector<8x32xf32>
    %322 = arith.addf %319, %321 : vector<8x32xf32>
    %323 = math.tanh %322 : vector<8x32xf32>
    %324 = arith.subf %277, %323 : vector<8x32xf32>
    %325 = arith.mulf %318, %324 : vector<8x32xf32>
    %326 = arith.addf %323, %325 : vector<8x32xf32>
    %327 = arith.addi %15, %c5_i32 : i32
    %328 = vector.broadcast %327 : i32 to vector<8x1xi32>
    %329 = arith.cmpi slt, %328, %12 : vector<8x1xi32>
    %330 = vector.shape_cast %329 : vector<8x1xi1> to vector<8x1xi1>
    %331 = vector.broadcast %330 : vector<8x1xi1> to vector<8x32xi1>
    %332 = arith.select %331, %326, %277 : vector<8x32xi1>, vector<8x32xf32>
    %333 = arith.mulf %326, %11 : vector<8x32xf32>
    %cst_66 = arith.constant dense<0.000000e+00> : vector<8xf32>
    %334 = vector.multi_reduction <add>, %333, %cst_66 [1] : vector<8x32xf32> to vector<8xf32>
    %335 = vector.shape_cast %334 : vector<8xf32> to vector<8x1xf32>
    %cst_67 = arith.constant -1.000000e+30 : f32
    %336 = vector.broadcast %cst_67 : f32 to vector<8x1xf32>
    %337 = arith.select %329, %335, %336 : vector<8x1xi1>, vector<8x1xf32>
    %338 = arith.maximumf %283, %337 : vector<8x1xf32>
    %339 = arith.subf %283, %338 : vector<8x1xf32>
    %340 = math.exp %339 : vector<8x1xf32>
    %341 = arith.subf %337, %338 : vector<8x1xf32>
    %342 = math.exp %341 : vector<8x1xf32>
    %343 = arith.mulf %340, %289 : vector<8x1xf32>
    %344 = arith.addf %343, %342 : vector<8x1xf32>
    %345 = vector.broadcast %340 : vector<8x1xf32> to vector<8x32xf32>
    %346 = arith.mulf %345, %294 : vector<8x32xf32>
    %347 = vector.broadcast %342 : vector<8x1xf32> to vector<8x32xf32>
    %348 = arith.mulf %347, %326 : vector<8x32xf32>
    %349 = arith.addf %346, %348 : vector<8x32xf32>
    %c6_i32 = arith.constant 6 : i32
    %c8_i32_68 = arith.constant 8 : i32
    %350 = arith.muli %c6_i32, %c8_i32_68 : i32
    %351 = tpu.assume_multiple %350, 8 : i32
    %352 = arith.index_cast %351 : i32 to index
    %c0_69 = arith.constant 0 : index
    %353 = vector.load %arg10[%352, %c0_69] : memref<64x96xf32, #tpu.memory_space<vmem>>, vector<8x96xf32>
    %354 = arith.truncf %332 : vector<8x32xf32> to vector<8x32xbf16>
    %cst_70 = arith.constant dense<0.000000e+00> : vector<8x96xf32>
    %355 = tpu.matmul %354, %13, %cst_70 {dimension_numbers = #tpu.dot_dimension_numbers<[1], [0], [0], [1], [0, 0, 1, 1], [], []>} : vector<8x32xbf16>, vector<32x96xbf16>, vector<8x96xf32> -> vector<8x96xf32>
    %356 = vector.broadcast %14 : vector<1x96xf32> to vector<8x96xf32>
    %357 = arith.addf %355, %356 : vector<8x96xf32>
    %358 = vector.extract_strided_slice %353 {offsets = [0, 0], sizes = [8, 32], strides = [1, 1]} : vector<8x96xf32> to vector<8x32xf32>
    %359 = vector.extract_strided_slice %357 {offsets = [0, 0], sizes = [8, 32], strides = [1, 1]} : vector<8x96xf32> to vector<8x32xf32>
    %360 = arith.addf %358, %359 : vector<8x32xf32>
    %361 = arith.negf %360 : vector<8x32xf32>
    %362 = math.exp %361 : vector<8x32xf32>
    %cst_71 = arith.constant 1.000000e+00 : f32
    %363 = vector.broadcast %cst_71 : f32 to vector<8x32xf32>
    %364 = arith.addf %363, %362 : vector<8x32xf32>
    %365 = arith.divf %363, %364 : vector<8x32xf32>
    %366 = vector.extract_strided_slice %353 {offsets = [0, 32], sizes = [8, 32], strides = [1, 1]} : vector<8x96xf32> to vector<8x32xf32>
    %367 = vector.extract_strided_slice %357 {offsets = [0, 32], sizes = [8, 32], strides = [1, 1]} : vector<8x96xf32> to vector<8x32xf32>
    %368 = arith.addf %366, %367 : vector<8x32xf32>
    %369 = arith.negf %368 : vector<8x32xf32>
    %370 = math.exp %369 : vector<8x32xf32>
    %cst_72 = arith.constant 1.000000e+00 : f32
    %371 = vector.broadcast %cst_72 : f32 to vector<8x32xf32>
    %372 = arith.addf %371, %370 : vector<8x32xf32>
    %373 = arith.divf %371, %372 : vector<8x32xf32>
    %374 = vector.extract_strided_slice %353 {offsets = [0, 64], sizes = [8, 32], strides = [1, 1]} : vector<8x96xf32> to vector<8x32xf32>
    %375 = vector.extract_strided_slice %357 {offsets = [0, 64], sizes = [8, 32], strides = [1, 1]} : vector<8x96xf32> to vector<8x32xf32>
    %376 = arith.mulf %365, %375 : vector<8x32xf32>
    %377 = arith.addf %374, %376 : vector<8x32xf32>
    %378 = math.tanh %377 : vector<8x32xf32>
    %379 = arith.subf %332, %378 : vector<8x32xf32>
    %380 = arith.mulf %373, %379 : vector<8x32xf32>
    %381 = arith.addf %378, %380 : vector<8x32xf32>
    %382 = arith.addi %15, %c6_i32 : i32
    %383 = vector.broadcast %382 : i32 to vector<8x1xi32>
    %384 = arith.cmpi slt, %383, %12 : vector<8x1xi32>
    %385 = vector.shape_cast %384 : vector<8x1xi1> to vector<8x1xi1>
    %386 = vector.broadcast %385 : vector<8x1xi1> to vector<8x32xi1>
    %387 = arith.select %386, %381, %332 : vector<8x32xi1>, vector<8x32xf32>
    %388 = arith.mulf %381, %11 : vector<8x32xf32>
    %cst_73 = arith.constant dense<0.000000e+00> : vector<8xf32>
    %389 = vector.multi_reduction <add>, %388, %cst_73 [1] : vector<8x32xf32> to vector<8xf32>
    %390 = vector.shape_cast %389 : vector<8xf32> to vector<8x1xf32>
    %cst_74 = arith.constant -1.000000e+30 : f32
    %391 = vector.broadcast %cst_74 : f32 to vector<8x1xf32>
    %392 = arith.select %384, %390, %391 : vector<8x1xi1>, vector<8x1xf32>
    %393 = arith.maximumf %338, %392 : vector<8x1xf32>
    %394 = arith.subf %338, %393 : vector<8x1xf32>
    %395 = math.exp %394 : vector<8x1xf32>
    %396 = arith.subf %392, %393 : vector<8x1xf32>
    %397 = math.exp %396 : vector<8x1xf32>
    %398 = arith.mulf %395, %344 : vector<8x1xf32>
    %399 = arith.addf %398, %397 : vector<8x1xf32>
    %400 = vector.broadcast %395 : vector<8x1xf32> to vector<8x32xf32>
    %401 = arith.mulf %400, %349 : vector<8x32xf32>
    %402 = vector.broadcast %397 : vector<8x1xf32> to vector<8x32xf32>
    %403 = arith.mulf %402, %381 : vector<8x32xf32>
    %404 = arith.addf %401, %403 : vector<8x32xf32>
    %c7_i32 = arith.constant 7 : i32
    %c8_i32_75 = arith.constant 8 : i32
    %405 = arith.muli %c7_i32, %c8_i32_75 : i32
    %406 = tpu.assume_multiple %405, 8 : i32
    %407 = arith.index_cast %406 : i32 to index
    %c0_76 = arith.constant 0 : index
    %408 = vector.load %arg10[%407, %c0_76] : memref<64x96xf32, #tpu.memory_space<vmem>>, vector<8x96xf32>
    %409 = arith.truncf %387 : vector<8x32xf32> to vector<8x32xbf16>
    %cst_77 = arith.constant dense<0.000000e+00> : vector<8x96xf32>
    %410 = tpu.matmul %409, %13, %cst_77 {dimension_numbers = #tpu.dot_dimension_numbers<[1], [0], [0], [1], [0, 0, 1, 1], [], []>} : vector<8x32xbf16>, vector<32x96xbf16>, vector<8x96xf32> -> vector<8x96xf32>
    %411 = vector.broadcast %14 : vector<1x96xf32> to vector<8x96xf32>
    %412 = arith.addf %410, %411 : vector<8x96xf32>
    %413 = vector.extract_strided_slice %408 {offsets = [0, 0], sizes = [8, 32], strides = [1, 1]} : vector<8x96xf32> to vector<8x32xf32>
    %414 = vector.extract_strided_slice %412 {offsets = [0, 0], sizes = [8, 32], strides = [1, 1]} : vector<8x96xf32> to vector<8x32xf32>
    %415 = arith.addf %413, %414 : vector<8x32xf32>
    %416 = arith.negf %415 : vector<8x32xf32>
    %417 = math.exp %416 : vector<8x32xf32>
    %cst_78 = arith.constant 1.000000e+00 : f32
    %418 = vector.broadcast %cst_78 : f32 to vector<8x32xf32>
    %419 = arith.addf %418, %417 : vector<8x32xf32>
    %420 = arith.divf %418, %419 : vector<8x32xf32>
    %421 = vector.extract_strided_slice %408 {offsets = [0, 32], sizes = [8, 32], strides = [1, 1]} : vector<8x96xf32> to vector<8x32xf32>
    %422 = vector.extract_strided_slice %412 {offsets = [0, 32], sizes = [8, 32], strides = [1, 1]} : vector<8x96xf32> to vector<8x32xf32>
    %423 = arith.addf %421, %422 : vector<8x32xf32>
    %424 = arith.negf %423 : vector<8x32xf32>
    %425 = math.exp %424 : vector<8x32xf32>
    %cst_79 = arith.constant 1.000000e+00 : f32
    %426 = vector.broadcast %cst_79 : f32 to vector<8x32xf32>
    %427 = arith.addf %426, %425 : vector<8x32xf32>
    %428 = arith.divf %426, %427 : vector<8x32xf32>
    %429 = vector.extract_strided_slice %408 {offsets = [0, 64], sizes = [8, 32], strides = [1, 1]} : vector<8x96xf32> to vector<8x32xf32>
    %430 = vector.extract_strided_slice %412 {offsets = [0, 64], sizes = [8, 32], strides = [1, 1]} : vector<8x96xf32> to vector<8x32xf32>
    %431 = arith.mulf %420, %430 : vector<8x32xf32>
    %432 = arith.addf %429, %431 : vector<8x32xf32>
    %433 = math.tanh %432 : vector<8x32xf32>
    %434 = arith.subf %387, %433 : vector<8x32xf32>
    %435 = arith.mulf %428, %434 : vector<8x32xf32>
    %436 = arith.addf %433, %435 : vector<8x32xf32>
    %437 = arith.addi %15, %c7_i32 : i32
    %438 = vector.broadcast %437 : i32 to vector<8x1xi32>
    %439 = arith.cmpi slt, %438, %12 : vector<8x1xi32>
    %440 = vector.shape_cast %439 : vector<8x1xi1> to vector<8x1xi1>
    %441 = vector.broadcast %440 : vector<8x1xi1> to vector<8x32xi1>
    %442 = arith.select %441, %436, %387 : vector<8x32xi1>, vector<8x32xf32>
    %443 = arith.mulf %436, %11 : vector<8x32xf32>
    %cst_80 = arith.constant dense<0.000000e+00> : vector<8xf32>
    %444 = vector.multi_reduction <add>, %443, %cst_80 [1] : vector<8x32xf32> to vector<8xf32>
    %445 = vector.shape_cast %444 : vector<8xf32> to vector<8x1xf32>
    %cst_81 = arith.constant -1.000000e+30 : f32
    %446 = vector.broadcast %cst_81 : f32 to vector<8x1xf32>
    %447 = arith.select %439, %445, %446 : vector<8x1xi1>, vector<8x1xf32>
    %448 = arith.maximumf %393, %447 : vector<8x1xf32>
    %449 = arith.subf %393, %448 : vector<8x1xf32>
    %450 = math.exp %449 : vector<8x1xf32>
    %451 = arith.subf %447, %448 : vector<8x1xf32>
    %452 = math.exp %451 : vector<8x1xf32>
    %453 = arith.mulf %450, %399 : vector<8x1xf32>
    %454 = arith.addf %453, %452 : vector<8x1xf32>
    %455 = vector.broadcast %450 : vector<8x1xf32> to vector<8x32xf32>
    %456 = arith.mulf %455, %404 : vector<8x32xf32>
    %457 = vector.broadcast %452 : vector<8x1xf32> to vector<8x32xf32>
    %458 = arith.mulf %457, %436 : vector<8x32xf32>
    %459 = arith.addf %456, %458 : vector<8x32xf32>
    %c8_i32_82 = arith.constant 8 : i32
    %c0_83 = arith.constant 0 : index
    %c0_84 = arith.constant 0 : index
    %460 = vector.load %arg11[%c0_83, %c0_84] : memref<8x32xf32, #tpu.memory_space<vmem>>, vector<8x32xf32>
    tpu.vector_store %arg11[%c0_83, %c0_84], %442 {strides = array<i32>} : memref<8x32xf32, #tpu.memory_space<vmem>>, vector<8x32xf32>,
    %c0_85 = arith.constant 0 : index
    %c0_86 = arith.constant 0 : index
    %461 = vector.load %arg12[%c0_85, %c0_86] : memref<8x1xf32, #tpu.memory_space<vmem>>, vector<8x1xf32>
    tpu.vector_store %arg12[%c0_85, %c0_86], %448 {strides = array<i32>} : memref<8x1xf32, #tpu.memory_space<vmem>>, vector<8x1xf32>,
    %c0_87 = arith.constant 0 : index
    %c0_88 = arith.constant 0 : index
    %462 = vector.load %arg13[%c0_87, %c0_88] : memref<8x1xf32, #tpu.memory_space<vmem>>, vector<8x1xf32>
    tpu.vector_store %arg13[%c0_87, %c0_88], %454 {strides = array<i32>} : memref<8x1xf32, #tpu.memory_space<vmem>>, vector<8x1xf32>,
    %c0_89 = arith.constant 0 : index
    %c0_90 = arith.constant 0 : index
    %463 = vector.load %arg14[%c0_89, %c0_90] : memref<8x32xf32, #tpu.memory_space<vmem>>, vector<8x32xf32>
    tpu.vector_store %arg14[%c0_89, %c0_90], %459 {strides = array<i32>} : memref<8x32xf32, #tpu.memory_space<vmem>>, vector<8x32xf32>,
    %c0_i32_91 = arith.constant 0 : i32
    %464 = arith.cmpi eq, %arg1, %c0_i32_91 : i32
    %465 = arith.extui %464 : i1 to i32
    %c0_i32_92 = arith.constant 0 : i32
    %466 = arith.cmpi ne, %465, %c0_i32_92 : i32
    scf.if %466 {
      %467 = vector.broadcast %454 : vector<8x1xf32> to vector<8x32xf32>
      %468 = arith.divf %459, %467 : vector<8x32xf32>
      %cst_93 = arith.constant 5.000000e-01 : f32
      %469 = vector.broadcast %cst_93 : f32 to vector<8x32xf32>
      %470 = arith.mulf %469, %442 : vector<8x32xf32>
      %cst_94 = arith.constant 5.000000e-01 : f32
      %471 = vector.broadcast %cst_94 : f32 to vector<8x32xf32>
      %472 = arith.mulf %471, %468 : vector<8x32xf32>
      %473 = arith.addf %470, %472 : vector<8x32xf32>
      %c0_95 = arith.constant 0 : index
      %c0_96 = arith.constant 0 : index
      %474 = vector.load %arg9[%c0_95, %c0_96] : memref<8x32xf32, #tpu.memory_space<vmem>>, vector<8x32xf32>
      tpu.vector_store %arg9[%c0_95, %c0_96], %473 {strides = array<i32>} : memref<8x32xf32, #tpu.memory_space<vmem>>, vector<8x32xf32>,
    } else {
    }
    return
  }
  func.func @transform_0(%arg0: i32, %arg1: i32) -> (i32, i32, i32) {
    %c0_i32 = arith.constant 0 : i32
    %c0_i32_0 = arith.constant 0 : i32
    return %arg0, %arg1, %c0_i32 : i32, i32, i32
  }
  func.func @transform_1(%arg0: i32, %arg1: i32) -> (i32, i32) {
    %c0_i32 = arith.constant 0 : i32
    %c0_i32_0 = arith.constant 0 : i32
    return %arg0, %c0_i32 : i32, i32
  }
  func.func @transform_2(%arg0: i32, %arg1: i32) -> (i32, i32) {
    %c0_i32 = arith.constant 0 : i32
    %c0_i32_0 = arith.constant 0 : i32
    return %arg0, %c0_i32 : i32, i32
  }
  func.func @transform_3(%arg0: i32, %arg1: i32) -> (i32, i32) {
    %c0_i32 = arith.constant 0 : i32
    %c0_i32_0 = arith.constant 0 : i32
    %c0_i32_1 = arith.constant 0 : i32
    return %c0_i32, %c0_i32_0 : i32, i32
  }
  func.func @transform_4(%arg0: i32, %arg1: i32) -> (i32, i32) {
    %c0_i32 = arith.constant 0 : i32
    %c0_i32_0 = arith.constant 0 : i32
    %c0_i32_1 = arith.constant 0 : i32
    return %c0_i32, %c0_i32_0 : i32, i32
  }
  func.func @transform_5(%arg0: i32, %arg1: i32) -> (i32, i32) {
    %c0_i32 = arith.constant 0 : i32
    %c0_i32_0 = arith.constant 0 : i32
    %c0_i32_1 = arith.constant 0 : i32
    return %c0_i32, %c0_i32_0 : i32, i32
  }
  func.func @transform_6(%arg0: i32, %arg1: i32) -> (i32, i32) {
    %c0_i32 = arith.constant 0 : i32
    %c0_i32_0 = arith.constant 0 : i32
    %c0_i32_1 = arith.constant 0 : i32
    return %c0_i32, %c0_i32_0 : i32, i32
  }
  func.func @transform_7(%arg0: i32, %arg1: i32) -> (i32, i32) {
    %c0_i32 = arith.constant 0 : i32
    %c0_i32_0 = arith.constant 0 : i32
    return %arg0, %c0_i32 : i32, i32
  }
}

</mosaic_0001>

<llo_original>
// kernel: tpu_custom_call.1
$region0: #{tpu_custom_call.1}
  #allocation0 [shape = 'u32[]', space=smem, size = 0x4, offset = 0x4, fixed_abs, tag = 'smem constant byte address 0x4 - core index']
  #allocation1 [shape = 'u32[144,128]{1,0:T(1,128)}', space=vmem, size = 0x12000, scoped, tag = 'internal scratch']
  #allocation2 [shape = 'f32[64,96]{1,0:T(8,128)}', space=vmem, size = 0x8000, scoped, tag = 'scratch operand']
  #allocation3 [shape = 'f32[8,32]{1,0:T(8,128)}', space=vmem, size = 0x1000, scoped, tag = 'scratch operand']
  #allocation4 [shape = 'f32[8,1]{1,0:T(8,128)}', space=vmem, size = 0x1000, scoped, tag = 'scratch operand']
  #allocation5 [shape = 'f32[8,1]{1,0:T(8,128)}', space=vmem, size = 0x1000, scoped, tag = 'scratch operand']
  #allocation6 [shape = 'f32[8,32]{1,0:T(8,128)}', space=vmem, size = 0x1000, scoped, tag = 'scratch operand']
  %s0 = inlined_call_operand.vmem [shape: bf16[1,64,32], index: 0, kind: input, shape index: {}]
  %s1 = inlined_call_operand.vmem [shape: f32[8,32], index: 1, kind: input, shape index: {}]
  %s2 = inlined_call_operand.vmem [shape: s32[8,1], index: 2, kind: input, shape index: {}]
  %s3 = inlined_call_operand.vmem [shape: bf16[32,96], index: 3, kind: input, shape index: {}]
  %s4 = inlined_call_operand.vmem [shape: bf16[32,96], index: 4, kind: input, shape index: {}]
  %s5 = inlined_call_operand.vmem [shape: f32[1,96], index: 5, kind: input, shape index: {}]
  %s6 = inlined_call_operand.vmem [shape: f32[1,96], index: 6, kind: input, shape index: {}]
  %s7 = inlined_call_operand.hbm [shape: f32[8,32], index: 7, kind: output, shape index: {}]
  %s8 = sld [smem:[#allocation0]]
  $region46: #{tpu_custom_call.1} parent=0
    _
  %s10 = ssub.s32 1, %s8
  %s11 = scalar_select 0, %s10, %s8
  $region1: #{tpu_custom_call.1} parent=0
    #allocation7 [shape = 'u8[4096]{0}', space=vmem, size = 0x1000, scoped, tag = 'output window, operand 0, single buffered']
    #allocation8 [shape = 's32[1]{0}', space=sflag, size = 0x4, scoped, tag = 'scoped memory for tpu_custom_call.1']
    %12 = vsyncpa [#allocation8], 0
    // Predicated region
    $region2: #{tpu_custom_call.1} parent=1 // pred_check
      _
    $region3: #{tpu_custom_call.1} parent=1 // pred_check_branch
      %14 = sbr.rel (0) target = $region5
    $region4: #{tpu_custom_call.1} parent=1 // pred_region
      _
    $region5: #{tpu_custom_call.1} parent=1 // pred_fallthru
      _
    // Predicated region
    $region6: #{tpu_custom_call.1} parent=1 // pred_check
      _
    $region7: #{tpu_custom_call.1} parent=1 // pred_check_branch
      %16 = sbr.rel (0) target = $region9
    $region8: #{tpu_custom_call.1} parent=1 // pred_region
      _
    $region9: #{tpu_custom_call.1} parent=1 // pred_fallthru
      _
    // Predicated region
    $region10: #{tpu_custom_call.1} parent=1 // pred_check
      _
    $region11: #{tpu_custom_call.1} parent=1 // pred_check_branch
      %18 = sbr.rel (0) target = $region13
    $region12: #{tpu_custom_call.1} parent=1 // pred_region
      _
    $region13: #{tpu_custom_call.1} parent=1 // pred_fallthru
      _
    // Predicated region
    $region14: #{tpu_custom_call.1} parent=1 // pred_check
      _
    $region15: #{tpu_custom_call.1} parent=1 // pred_check_branch
      %20 = sbr.rel (0) target = $region17
    $region16: #{tpu_custom_call.1} parent=1 // pred_region
      _
    $region17: #{tpu_custom_call.1} parent=1 // pred_fallthru
      _
    // Predicated region
    $region18: #{tpu_custom_call.1} parent=1 // pred_check
      _
    $region19: #{tpu_custom_call.1} parent=1 // pred_check_branch
      %22 = sbr.rel (0) target = $region21
    $region20: #{tpu_custom_call.1} parent=1 // pred_region
      _
    $region21: #{tpu_custom_call.1} parent=1 // pred_fallthru
      _
    // Predicated region
    $region22: #{tpu_custom_call.1} parent=1 // pred_check
      _
    $region23: #{tpu_custom_call.1} parent=1 // pred_check_branch
      %24 = sbr.rel (0) target = $region25
    $region24: #{tpu_custom_call.1} parent=1 // pred_region
      _
    $region25: #{tpu_custom_call.1} parent=1 // pred_fallthru
      _
    // Predicated region
    $region26: #{tpu_custom_call.1} parent=1 // pred_check
      _
    $region27: #{tpu_custom_call.1} parent=1 // pred_check_branch
      %26 = sbr.rel (0) target = $region29
    $region28: #{tpu_custom_call.1} parent=1 // pred_region
      _
    $region29: #{tpu_custom_call.1} parent=1 // pred_fallthru
      _
    %p28 = scmp.eq.s32.totalorder 0, 0
    // Predicated region
    $region30: #{tpu_custom_call.1} parent=1 // pred_check
      %p29 = pneg %p28
    $region31: #{tpu_custom_call.1} parent=1 // pred_check_branch
      %31 = sbr.rel (%p29) target = $region33
    $region32: #{tpu_custom_call.1} parent=1 // pred_region
      %vm32 = vcmask 261120
      %33 = vst.msk [vmem:[#allocation3] sm:$0xff] %vm32, 0.0
      %vm34 = vcmask 7168
      %35 = vst.msk [vmem:[#allocation4] sm:$0xff] %vm34, -1e+30
      %36 = vst.msk [vmem:[#allocation5] sm:$0xff] %vm34, 0.0
      %37 = vst.msk [vmem:[#allocation6] sm:$0xff] %vm32, 0.0
    $region33: #{tpu_custom_call.1} parent=1 // pred_fallthru
      _
    %v38 = vld [vmem:[%s0] sm:$0xf]
    %v39 = vld [vmem:[%s0 + $0x4] sm:$0xf]
    %v40 = vld [vmem:[%s0 + $0x8] sm:$0xf]
    %v41 = vld [vmem:[%s0 + $0xc] sm:$0xf]
    %v42 = vld [vmem:[%s0 + $0x10] sm:$0xf]
    %v43 = vld [vmem:[%s0 + $0x14] sm:$0xf]
    %v44 = vld [vmem:[%s0 + $0x18] sm:$0xf]
    %v45 = vld [vmem:[%s0 + $0x1c] sm:$0xf]
    %v46 = vld [vmem:[%s3] sm:$0xf]
    %v47 = vld [vmem:[%s3 + $0x4] sm:$0xf]
    %v48 = vld [vmem:[%s3 + $0x8] sm:$0xf]
    %v49 = vld [vmem:[%s3 + $0xc] sm:$0xf]
    %v50 = vld [vmem:[%s5] sm:$0x1]
    %v52 = vlaneseq
    %v53 = vshrl.u32 %v52, 7
    %v54 = vsub.s32 0, %v53
    %v55 = vrot.slane %v50, %v54
    %v65 = vunpack.c.l.b16 %v38
    %v66 = vunpack.c.l.b16 %v39
    %v67 = vunpack.c.l.b16 %v40
    %v68 = vunpack.c.l.b16 %v41
    %v69 = vunpack.c.l.b16 %v42
    %v70 = vunpack.c.l.b16 %v43
    %v71 = vunpack.c.l.b16 %v44
    %v72 = vunpack.c.l.b16 %v45
    %v73 = vpack.c.b16 %v66, %v65
    %v74 = vpack.c.b16 %v68, %v67
    %v75 = vpack.c.b16 %v70, %v69
    %v76 = vpack.c.b16 %v72, %v71
    %v81 = vunpack.c.l.b16 %v46
    %v82 = vunpack.c.l.b16 %v47
    %v83 = vunpack.c.l.b16 %v48
    %v84 = vunpack.c.l.b16 %v49
    %v85 = vpack.c.b16 %v82, %v81
    %v86 = vpack.c.b16 %v84, %v83
    %vm89 = vcmask 261120
    %v91 = vsel %vm89, %v73, 0
    %v94 = vsel %vm89, %v74, 0
    %v97 = vsel %vm89, %v75, 0
    %v100 = vsel %vm89, %v76, 0
    %102 = vmatprep.subr.bf16.mxu0 0
    %103 = vmatpush1.bf16.msra.mxu0 0
    %104 = vmatprep.subr.bf16.mxu0 0
    %105 = vmatpush1.bf16.msra.mxu0 0
    %106 = vmatprep.subr.bf16.mxu0 0
    %107 = vmatpush1.bf16.msra.mxu0 0
    %108 = vmatprep.subr.bf16.mxu0 0
    %109 = vmatpush1.bf16.msra.mxu0 0
    %110 = vmatprep.subr.bf16.mxu0 0
    %111 = vmatpush1.bf16.msra.mxu0 0
    %112 = vmatprep.subr.bf16.mxu0 0
    %113 = vmatpush1.bf16.msra.mxu0 0
    %114 = vmatprep.subr.bf16.mxu0 0
    %115 = vmatpush1.bf16.msra.mxu0 %v86
    %116 = vmatprep.subr.bf16.mxu0 0
    %117 = vmatpush1.bf16.msra.mxu0 %v85
    %118 = vmatprep.subr.bf16.mxu0 0
    %119 = vmatpush2.bf16.msra.mxu0 0
    %120 = vmatprep.subr.bf16.mxu0 0
    %121 = vmatpush2.bf16.msra.mxu0 0
    %122 = vmatprep.subr.bf16.mxu0 0
    %123 = vmatpush2.bf16.msra.mxu0 0
    %124 = vmatprep.subr.bf16.mxu0 0
    %125 = vmatpush2.bf16.msra.mxu0 0
    %126 = vmatprep.subr.bf16.mxu0 0
    %127 = vmatpush2.bf16.msra.mxu0 0
    %128 = vmatprep.subr.bf16.mxu0 0
    %129 = vmatpush2.bf16.msra.mxu0 0
    %130 = vmatprep.subr.bf16.mxu0 0
    %131 = vmatpush2.bf16.msra.mxu0 0
    %132 = vmatprep.subr.bf16.mxu0 0
    %133 = vmatpush2.bf16.msra.mxu0 0
    %134 = vmatprep.mubr.bf16.mxu0 0
    %135 = vmatmul.mubr.bf16.gmra.mxu0 %v91
    %v136 = vpop.f32.mrf.mxu0
    %v137 = vadd.f32 %v55, %v136
    %v138 = vpop.f32.mrf.mxu0
    %v139 = vpop.f32.mrf.mxu0
    %v140 = vadd.f32 %v55, %v139
    %v141 = vpop.f32.mrf.mxu0
    %142 = vmatprep.mubr.bf16.mxu0 0
    %143 = vmatmul.mubr.bf16.gmra.mxu0 %v94
    %v144 = vpop.f32.mrf.mxu0
    %v145 = vadd.f32 %v55, %v144
    %v146 = vpop.f32.mrf.mxu0
    %v147 = vpop.f32.mrf.mxu0
    %v148 = vadd.f32 %v55, %v147
    %v149 = vpop.f32.mrf.mxu0
    %150 = vmatprep.mubr.bf16.mxu0 0
    %151 = vmatmul.mubr.bf16.gmra.mxu0 %v97
    %v152 = vpop.f32.mrf.mxu0
    %v153 = vadd.f32 %v55, %v152
    %v154 = vpop.f32.mrf.mxu0
    %v155 = vpop.f32.mrf.mxu0
    %v156 = vadd.f32 %v55, %v155
    %v157 = vpop.f32.mrf.mxu0
    %158 = vmatprep.mubr.bf16.mxu0 0
    %159 = vmatmul.mubr.bf16.gmra.mxu0 %v100
    %v160 = vpop.f32.mrf.mxu0
    %v161 = vadd.f32 %v55, %v160
    %v162 = vpop.f32.mrf.mxu0
    %v163 = vpop.f32.mrf.mxu0
    %v164 = vadd.f32 %v55, %v163
    %v165 = vpop.f32.mrf.mxu0
    %166 = vdwg.mxu0
    %vm167 = vcmask 785408
    %168 = vst.msk [vmem:[#allocation2] sm:$0xff] %vm167, %v137
    %169 = vst.msk [vmem:[#allocation2 + $0x8] sm:$0xff] %vm167, %v140
    %170 = vst.msk [vmem:[#allocation2 + $0x10] sm:$0xff] %vm167, %v145
    %171 = vst.msk [vmem:[#allocation2 + $0x18] sm:$0xff] %vm167, %v148
    %172 = vst.msk [vmem:[#allocation2 + $0x20] sm:$0xff] %vm167, %v153
    %173 = vst.msk [vmem:[#allocation2 + $0x28] sm:$0xff] %vm167, %v156
    %174 = vst.msk [vmem:[#allocation2 + $0x30] sm:$0xff] %vm167, %v161
    %175 = vst.msk [vmem:[#allocation2 + $0x38] sm:$0xff] %vm167, %v164
    %v176 = vld [vmem:[%s1] sm:$0xff]
    %v177 = vld [vmem:[%s2] sm:$0xff]
    %v178 = vld [vmem:[%s4] sm:$0xf]
    %v179 = vld [vmem:[%s4 + $0x4] sm:$0xf]
    %v180 = vld [vmem:[%s4 + $0x8] sm:$0xf]
    %v181 = vld [vmem:[%s4 + $0xc] sm:$0xf]
    %v182 = vld [vmem:[%s6] sm:$0x1]
    %s183 = smul.u32 0, 8
    %v184 = vld [vmem:[#allocation3] sm:$0xff]
    %v185 = vld [vmem:[#allocation4] sm:$0xff]
    %v186 = vld [vmem:[#allocation5] sm:$0xff]
    %v187 = vld [vmem:[#allocation6] sm:$0xff]
    %v188 = vld [vmem:[#allocation2] sm:$0xff]
    %v189 = vpack.c.bf16 %v184, %v184
    %v191 = vlaneseq
    %v192 = vshrl.u32 %v191, 7
    %v193 = vsub.s32 0, %v192
    %v194 = vrot.slane %v182, %v193
    %v200 = vunpack.c.l.b16 %v178
    %v201 = vunpack.c.l.b16 %v179
    %v202 = vunpack.c.l.b16 %v180
    %v203 = vunpack.c.l.b16 %v181
    %v204 = vpack.c.b16 %v201, %v200
    %v205 = vpack.c.b16 %v203, %v202
    %v209 = vsel %vm89, %v189, 0
    %211 = vmatprep.subr.bf16.mxu0 0
    %212 = vmatpush1.bf16.msra.mxu0 0
    %213 = vmatprep.subr.bf16.mxu0 0
    %214 = vmatpush1.bf16.msra.mxu0 0
    %215 = vmatprep.subr.bf16.mxu0 0
    %216 = vmatpush1.bf16.msra.mxu0 0
    %217 = vmatprep.subr.bf16.mxu0 0
    %218 = vmatpush1.bf16.msra.mxu0 0
    %219 = vmatprep.subr.bf16.mxu0 0
    %220 = vmatpush1.bf16.msra.mxu0 0
    %221 = vmatprep.subr.bf16.mxu0 0
    %222 = vmatpush1.bf16.msra.mxu0 0
    %223 = vmatprep.subr.bf16.mxu0 0
    %224 = vmatpush1.bf16.msra.mxu0 %v205
    %225 = vmatprep.subr.bf16.mxu0 0
    %226 = vmatpush1.bf16.msra.mxu0 %v204
    %227 = vmatprep.subr.bf16.mxu0 0
    %228 = vmatpush2.bf16.msra.mxu0 0
    %229 = vmatprep.subr.bf16.mxu0 0
    %230 = vmatpush2.bf16.msra.mxu0 0
    %231 = vmatprep.subr.bf16.mxu0 0
    %232 = vmatpush2.bf16.msra.mxu0 0
    %233 = vmatprep.subr.bf16.mxu0 0
    %234 = vmatpush2.bf16.msra.mxu0 0
    %235 = vmatprep.subr.bf16.mxu0 0
    %236 = vmatpush2.bf16.msra.mxu0 0
    %237 = vmatprep.subr.bf16.mxu0 0
    %238 = vmatpush2.bf16.msra.mxu0 0
    %239 = vmatprep.subr.bf16.mxu0 0
    %240 = vmatpush2.bf16.msra.mxu0 0
    %241 = vmatprep.subr.bf16.mxu0 0
    %242 = vmatpush2.bf16.msra.mxu0 0
    %243 = vmatprep.mubr.bf16.mxu0 0
    %244 = vmatmul.mubr.bf16.gmra.mxu0 %v209
    %v245 = vpop.f32.mrf.mxu0
    %v246 = vadd.f32 %v194, %v245
    %v247 = vpop.f32.mrf.mxu0
    %v248 = vpop.f32.mrf.mxu0
    %v249 = vpop.f32.mrf.mxu0
    %250 = vdwg.mxu0
    %v251 = vadd.f32 %v188, %v246
    %v252 = vxor.u32 %v251, 2147483648
    %v253 = vmul.f32 %v252, 1.442695
    %v254 = vpow.pop %v253
    %v255 = vadd.f32 %v254, 1.0
    %v256 = vrcp.pop %v255
    %v257 = vmul.f32 1.0, %v256
    %259 = vrot.lane.b32.xlu0 %v246, 64
    %v260 = vpop.permute.xlu0 %259
    %v262 = vmul.f32 %v257, %v260
    %264 = vrot.lane.b32.xlu0 %v262, 64
    %v265 = vpop.permute.xlu0 %264
    %v267 = vadd.f32 %v188, %v265
    %v268 = vtanh.pop %v267
    %270 = vrot.lane.b32.xlu0 %v268, 64
    %v271 = vpop.permute.xlu0 %270
    %v273 = vsub.f32 %v184, %v271
    %275 = vrot.lane.b32.xlu0 %v273, 32
    %v276 = vpop.permute.xlu0 %275
    %v278 = vmul.f32 %v257, %v276
    %280 = vrot.lane.b32.xlu0 %v278, 32
    %v281 = vpop.permute.xlu0 %280
    %v283 = vadd.f32 %v268, %v281
    %v284 = vstv %s183
    %vm285 = vcmp.lt.s32.totalorder %v284, %v177
    %v286 = vsel %vm285, 1, 0
    %287 = vset.pattern.permute.xlu0 0
    %288 = vperm.xlu0 %287, %v286
    %v289 = vpop.permute.xlu0 %288
    %vm290 = vcmp.eq.s32.totalorder %v289, 1
    %292 = vrot.lane.b32.xlu0 %v184, 64
    %v293 = vpop.permute.xlu0 %292
    %v295 = vsel %vm290, %v283, %v293
    %297 = vrot.lane.b32.xlu0 %v176, 64
    %v298 = vpop.permute.xlu0 %297
    %v300 = vmul.f32 %v283, %v298
    %302 = vrot.lane.b32.xlu0 %v300, 64
    %v303 = vpop.permute.xlu0 %302
    %v305 = vsel %vm89, %v303, 0.0
    %306 = vadd.xlane.f32.xlu0 %v305
    %v307 = vpop.xlane.xlu0 %306
    %v308 = vsel %vm285, %v307, -1e+30
    %v309 = vmax.f32 %v185, %v308
    %v310 = vsub.f32 %v185, %v309
    %v311 = vmul.f32 %v310, 1.442695
    %v312 = vpow.pop %v311
    %v313 = vsub.f32 %v308, %v309
    %v314 = vmul.f32 %v313, 1.442695
    %v315 = vpow.pop %v314
    %v316 = vmul.f32 %v312, %v186
    %v317 = vadd.f32 %v316, %v315
    %319 = vset.pattern.permute.xlu0 0
    %320 = vperm.xlu0 %319, %v312
    %v321 = vpop.permute.xlu0 %320
    %v323 = vmul.f32 %v321, %v187
    %325 = vset.pattern.permute.xlu0 0
    %326 = vperm.xlu0 %325, %v315
    %v327 = vpop.permute.xlu0 %326
    %v329 = vmul.f32 %v327, %v283
    %331 = vrot.lane.b32.xlu0 %v329, 64
    %v332 = vpop.permute.xlu0 %331
    %v334 = vadd.f32 %v323, %v332
    %s335 = scalar_lea.vmem [#allocation2], 8
    %v336 = vld [vmem:[%s335] sm:$0xff]
    %v337 = vpack.c.bf16 %v295, %v295
    %339 = vrot.lane.b32.xlu0 %v337, 64
    %v340 = vpop.permute.xlu0 %339
    %v342 = vsel %vm89, %v340, 0
    %344 = vmatprep.subr.bf16.mxu0 0
    %345 = vmatpush1.bf16.msra.mxu0 0
    %346 = vmatprep.subr.bf16.mxu0 0
    %347 = vmatpush1.bf16.msra.mxu0 0
    %348 = vmatprep.subr.bf16.mxu0 0
    %349 = vmatpush1.bf16.msra.mxu0 0
    %350 = vmatprep.subr.bf16.mxu0 0
    %351 = vmatpush1.bf16.msra.mxu0 0
    %352 = vmatprep.subr.bf16.mxu0 0
    %353 = vmatpush1.bf16.msra.mxu0 0
    %354 = vmatprep.subr.bf16.mxu0 0
    %355 = vmatpush1.bf16.msra.mxu0 0
    %356 = vmatprep.subr.bf16.mxu0 0
    %357 = vmatpush1.bf16.msra.mxu0 %v205
    %358 = vmatprep.subr.bf16.mxu0 0
    %359 = vmatpush1.bf16.msra.mxu0 %v204
    %360 = vmatprep.subr.bf16.mxu0 0
    %361 = vmatpush2.bf16.msra.mxu0 0
    %362 = vmatprep.subr.bf16.mxu0 0
    %363 = vmatpush2.bf16.msra.mxu0 0
    %364 = vmatprep.subr.bf16.mxu0 0
    %365 = vmatpush2.bf16.msra.mxu0 0
    %366 = vmatprep.subr.bf16.mxu0 0
    %367 = vmatpush2.bf16.msra.mxu0 0
    %368 = vmatprep.subr.bf16.mxu0 0
    %369 = vmatpush2.bf16.msra.mxu0 0
    %370 = vmatprep.subr.bf16.mxu0 0
    %371 = vmatpush2.bf16.msra.mxu0 0
    %372 = vmatprep.subr.bf16.mxu0 0
    %373 = vmatpush2.bf16.msra.mxu0 0
    %374 = vmatprep.subr.bf16.mxu0 0
    %375 = vmatpush2.bf16.msra.mxu0 0
    %376 = vmatprep.mubr.bf16.mxu0 0
    %377 = vmatmul.mubr.bf16.gmra.mxu0 %v342
    %v378 = vpop.f32.mrf.mxu0
    %v379 = vadd.f32 %v194, %v378
    %v380 = vpop.f32.mrf.mxu0
    %v381 = vpop.f32.mrf.mxu0
    %v382 = vpop.f32.mrf.mxu0
    %383 = vdwg.mxu0
    %v384 = vadd.f32 %v336, %v379
    %v385 = vxor.u32 %v384, 2147483648
    %v386 = vmul.f32 %v385, 1.442695
    %v387 = vpow.pop %v386
    %v388 = vadd.f32 %v387, 1.0
    %v389 = vrcp.pop %v388
    %v390 = vmul.f32 1.0, %v389
    %392 = vrot.lane.b32.xlu0 %v379, 64
    %v393 = vpop.permute.xlu0 %392
    %v395 = vmul.f32 %v390, %v393
    %397 = vrot.lane.b32.xlu0 %v395, 64
    %v398 = vpop.permute.xlu0 %397
    %v400 = vadd.f32 %v336, %v398
    %v401 = vtanh.pop %v400
    %v402 = vsub.f32 %v295, %v401
    %404 = vrot.lane.b32.xlu0 %v402, 96
    %v405 = vpop.permute.xlu0 %404
    %v407 = vmul.f32 %v390, %v405
    %409 = vrot.lane.b32.xlu0 %v407, 32
    %v410 = vpop.permute.xlu0 %409
    %v412 = vadd.f32 %v401, %v410
    %s413 = sadd.s32 %s183, 1
    %v414 = vstv %s413
    %vm415 = vcmp.lt.s32.totalorder %v414, %v177
    %v416 = vsel %vm415, 1, 0
    %417 = vset.pattern.permute.xlu0 0
    %418 = vperm.xlu0 %417, %v416
    %v419 = vpop.permute.xlu0 %418
    %vm420 = vcmp.eq.s32.totalorder %v419, 1
    %v421 = vsel %vm420, %v412, %v295
    %v422 = vmul.f32 %v412, %v298
    %424 = vrot.lane.b32.xlu0 %v422, 64
    %v425 = vpop.permute.xlu0 %424
    %v427 = vsel %vm89, %v425, 0.0
    %428 = vadd.xlane.f32.xlu0 %v427
    %v429 = vpop.xlane.xlu0 %428
    %v430 = vsel %vm415, %v429, -1e+30
    %v431 = vmax.f32 %v309, %v430
    %v432 = vsub.f32 %v309, %v431
    %v433 = vmul.f32 %v432, 1.442695
    %v434 = vpow.pop %v433
    %v435 = vsub.f32 %v430, %v431
    %v436 = vmul.f32 %v435, 1.442695
    %v437 = vpow.pop %v436
    %v438 = vmul.f32 %v434, %v317
    %v439 = vadd.f32 %v438, %v437
    %441 = vset.pattern.permute.xlu0 0
    %442 = vperm.xlu0 %441, %v434
    %v443 = vpop.permute.xlu0 %442
    %v445 = vmul.f32 %v443, %v334
    %447 = vset.pattern.permute.xlu0 0
    %448 = vperm.xlu0 %447, %v437
    %v449 = vpop.permute.xlu0 %448
    %v451 = vmul.f32 %v449, %v412
    %453 = vrot.lane.b32.xlu0 %v451, 64
    %v454 = vpop.permute.xlu0 %453
    %v456 = vadd.f32 %v445, %v454
    %s457 = scalar_lea.vmem [#allocation2], 16
    %v458 = vld [vmem:[%s457] sm:$0xff]
    %v459 = vpack.c.bf16 %v421, %v421
    %461 = vrot.lane.b32.xlu0 %v459, 64
    %v462 = vpop.permute.xlu0 %461
    %v464 = vsel %vm89, %v462, 0
    %466 = vmatprep.subr.bf16.mxu0 0
    %467 = vmatpush1.bf16.msra.mxu0 0
    %468 = vmatprep.subr.bf16.mxu0 0
    %469 = vmatpush1.bf16.msra.mxu0 0
    %470 = vmatprep.subr.bf16.mxu0 0
    %471 = vmatpush1.bf16.msra.mxu0 0
    %472 = vmatprep.subr.bf16.mxu0 0
    %473 = vmatpush1.bf16.msra.mxu0 0
    %474 = vmatprep.subr.bf16.mxu0 0
    %475 = vmatpush1.bf16.msra.mxu0 0
    %476 = vmatprep.subr.bf16.mxu0 0
    %477 = vmatpush1.bf16.msra.mxu0 0
    %478 = vmatprep.subr.bf16.mxu0 0
    %479 = vmatpush1.bf16.msra.mxu0 %v205
    %480 = vmatprep.subr.bf16.mxu0 0
    %481 = vmatpush1.bf16.msra.mxu0 %v204
    %482 = vmatprep.subr.bf16.mxu0 0
    %483 = vmatpush2.bf16.msra.mxu0 0
    %484 = vmatprep.subr.bf16.mxu0 0
    %485 = vmatpush2.bf16.msra.mxu0 0
    %486 = vmatprep.subr.bf16.mxu0 0
    %487 = vmatpush2.bf16.msra.mxu0 0
    %488 = vmatprep.subr.bf16.mxu0 0
    %489 = vmatpush2.bf16.msra.mxu0 0
    %490 = vmatprep.subr.bf16.mxu0 0
    %491 = vmatpush2.bf16.msra.mxu0 0
    %492 = vmatprep.subr.bf16.mxu0 0
    %493 = vmatpush2.bf16.msra.mxu0 0
    %494 = vmatprep.subr.bf16.mxu0 0
    %495 = vmatpush2.bf16.msra.mxu0 0
    %496 = vmatprep.subr.bf16.mxu0 0
    %497 = vmatpush2.bf16.msra.mxu0 0
    %498 = vmatprep.mubr.bf16.mxu0 0
    %499 = vmatmul.mubr.bf16.gmra.mxu0 %v464
    %v500 = vpop.f32.mrf.mxu0
    %v501 = vadd.f32 %v194, %v500
    %v502 = vpop.f32.mrf.mxu0
    %v503 = vpop.f32.mrf.mxu0
    %v504 = vpop.f32.mrf.mxu0
    %505 = vdwg.mxu0
    %v506 = vadd.f32 %v458, %v501
    %v507 = vxor.u32 %v506, 2147483648
    %v508 = vmul.f32 %v507, 1.442695
    %v509 = vpow.pop %v508
    %v510 = vadd.f32 %v509, 1.0
    %v511 = vrcp.pop %v510
    %v512 = vmul.f32 1.0, %v511
    %514 = vrot.lane.b32.xlu0 %v501, 64
    %v515 = vpop.permute.xlu0 %514
    %v517 = vmul.f32 %v512, %v515
    %519 = vrot.lane.b32.xlu0 %v517, 64
    %v520 = vpop.permute.xlu0 %519
    %v522 = vadd.f32 %v458, %v520
    %v523 = vtanh.pop %v522
    %v524 = vsub.f32 %v421, %v523
    %526 = vrot.lane.b32.xlu0 %v524, 96
    %v527 = vpop.permute.xlu0 %526
    %v529 = vmul.f32 %v512, %v527
    %531 = vrot.lane.b32.xlu0 %v529, 32
    %v532 = vpop.permute.xlu0 %531
    %v534 = vadd.f32 %v523, %v532
    %s535 = sadd.s32 %s183, 2
    %v536 = vstv %s535
    %vm537 = vcmp.lt.s32.totalorder %v536, %v177
    %v538 = vsel %vm537, 1, 0
    %539 = vset.pattern.permute.xlu0 0
    %540 = vperm.xlu0 %539, %v538
    %v541 = vpop.permute.xlu0 %540
    %vm542 = vcmp.eq.s32.totalorder %v541, 1
    %v543 = vsel %vm542, %v534, %v421
    %v544 = vmul.f32 %v534, %v298
    %546 = vrot.lane.b32.xlu0 %v544, 64
    %v547 = vpop.permute.xlu0 %546
    %v549 = vsel %vm89, %v547, 0.0
    %550 = vadd.xlane.f32.xlu0 %v549
    %v551 = vpop.xlane.xlu0 %550
    %v552 = vsel %vm537, %v551, -1e+30
    %v553 = vmax.f32 %v431, %v552
    %v554 = vsub.f32 %v431, %v553
    %v555 = vmul.f32 %v554, 1.442695
    %v556 = vpow.pop %v555
    %v557 = vsub.f32 %v552, %v553
    %v558 = vmul.f32 %v557, 1.442695
    %v559 = vpow.pop %v558
    %v560 = vmul.f32 %v556, %v439
    %v561 = vadd.f32 %v560, %v559
    %563 = vset.pattern.permute.xlu0 0
    %564 = vperm.xlu0 %563, %v556
    %v565 = vpop.permute.xlu0 %564
    %v567 = vmul.f32 %v565, %v456
    %569 = vset.pattern.permute.xlu0 0
    %570 = vperm.xlu0 %569, %v559
    %v571 = vpop.permute.xlu0 %570
    %v573 = vmul.f32 %v571, %v534
    %575 = vrot.lane.b32.xlu0 %v573, 64
    %v576 = vpop.permute.xlu0 %575
    %v578 = vadd.f32 %v567, %v576
    %s579 = scalar_lea.vmem [#allocation2], 24
    %v580 = vld [vmem:[%s579] sm:$0xff]
    %v581 = vpack.c.bf16 %v543, %v543
    %583 = vrot.lane.b32.xlu0 %v581, 64
    %v584 = vpop.permute.xlu0 %583
    %v586 = vsel %vm89, %v584, 0
    %588 = vmatprep.subr.bf16.mxu0 0
    %589 = vmatpush1.bf16.msra.mxu0 0
    %590 = vmatprep.subr.bf16.mxu0 0
    %591 = vmatpush1.bf16.msra.mxu0 0
    %592 = vmatprep.subr.bf16.mxu0 0
    %593 = vmatpush1.bf16.msra.mxu0 0
    %594 = vmatprep.subr.bf16.mxu0 0
    %595 = vmatpush1.bf16.msra.mxu0 0
    %596 = vmatprep.subr.bf16.mxu0 0
    %597 = vmatpush1.bf16.msra.mxu0 0
    %598 = vmatprep.subr.bf16.mxu0 0
    %599 = vmatpush1.bf16.msra.mxu0 0
    %600 = vmatprep.subr.bf16.mxu0 0
    %601 = vmatpush1.bf16.msra.mxu0 %v205
    %602 = vmatprep.subr.bf16.mxu0 0
    %603 = vmatpush1.bf16.msra.mxu0 %v204
    %604 = vmatprep.subr.bf16.mxu0 0
    %605 = vmatpush2.bf16.msra.mxu0 0
    %606 = vmatprep.subr.bf16.mxu0 0
    %607 = vmatpush2.bf16.msra.mxu0 0
    %608 = vmatprep.subr.bf16.mxu0 0
    %609 = vmatpush2.bf16.msra.mxu0 0
    %610 = vmatprep.subr.bf16.mxu0 0
    %611 = vmatpush2.bf16.msra.mxu0 0
    %612 = vmatprep.subr.bf16.mxu0 0
    %613 = vmatpush2.bf16.msra.mxu0 0
    %614 = vmatprep.subr.bf16.mxu0 0
    %615 = vmatpush2.bf16.msra.mxu0 0
    %616 = vmatprep.subr.bf16.mxu0 0
    %617 = vmatpush2.bf16.msra.mxu0 0
    %618 = vmatprep.subr.bf16.mxu0 0
    %619 = vmatpush2.bf16.msra.mxu0 0
    %620 = vmatprep.mubr.bf16.mxu0 0
    %621 = vmatmul.mubr.bf16.gmra.mxu0 %v586
    %v622 = vpop.f32.mrf.mxu0
    %v623 = vadd.f32 %v194, %v622
    %v624 = vpop.f32.mrf.mxu0
    %v625 = vpop.f32.mrf.mxu0
    %v626 = vpop.f32.mrf.mxu0
    %627 = vdwg.mxu0
    %v628 = vadd.f32 %v580, %v623
    %v629 = vxor.u32 %v628, 2147483648
    %v630 = vmul.f32 %v629, 1.442695
    %v631 = vpow.pop %v630
    %v632 = vadd.f32 %v631, 1.0
    %v633 = vrcp.pop %v632
    %v634 = vmul.f32 1.0, %v633
    %636 = vrot.lane.b32.xlu0 %v623, 64
    %v637 = vpop.permute.xlu0 %636
    %v639 = vmul.f32 %v634, %v637
    %641 = vrot.lane.b32.xlu0 %v639, 64
    %v642 = vpop.permute.xlu0 %641
    %v644 = vadd.f32 %v580, %v642
    %v645 = vtanh.pop %v644
    %v646 = vsub.f32 %v543, %v645
    %648 = vrot.lane.b32.xlu0 %v646, 96
    %v649 = vpop.permute.xlu0 %648
    %v651 = vmul.f32 %v634, %v649
    %653 = vrot.lane.b32.xlu0 %v651, 32
    %v654 = vpop.permute.xlu0 %653
    %v656 = vadd.f32 %v645, %v654
    %s657 = sadd.s32 %s183, 3
    %v658 = vstv %s657
    %vm659 = vcmp.lt.s32.totalorder %v658, %v177
    %v660 = vsel %vm659, 1, 0
    %661 = vset.pattern.permute.xlu0 0
    %662 = vperm.xlu0 %661, %v660
    %v663 = vpop.permute.xlu0 %662
    %vm664 = vcmp.eq.s32.totalorder %v663, 1
    %v665 = vsel %vm664, %v656, %v543
    %v666 = vmul.f32 %v656, %v298
    %668 = vrot.lane.b32.xlu0 %v666, 64
    %v669 = vpop.permute.xlu0 %668
    %v671 = vsel %vm89, %v669, 0.0
    %672 = vadd.xlane.f32.xlu0 %v671
    %v673 = vpop.xlane.xlu0 %672
    %v674 = vsel %vm659, %v673, -1e+30
    %v675 = vmax.f32 %v553, %v674
    %v676 = vsub.f32 %v553, %v675
    %v677 = vmul.f32 %v676, 1.442695
    %v678 = vpow.pop %v677
    %v679 = vsub.f32 %v674, %v675
    %v680 = vmul.f32 %v679, 1.442695
    %v681 = vpow.pop %v680
    %v682 = vmul.f32 %v678, %v561
    %v683 = vadd.f32 %v682, %v681
    %685 = vset.pattern.permute.xlu0 0
    %686 = vperm.xlu0 %685, %v678
    %v687 = vpop.permute.xlu0 %686
    %v689 = vmul.f32 %v687, %v578
    %691 = vset.pattern.permute.xlu0 0
    %692 = vperm.xlu0 %691, %v681
    %v693 = vpop.permute.xlu0 %692
    %v695 = vmul.f32 %v693, %v656
    %697 = vrot.lane.b32.xlu0 %v695, 64
    %v698 = vpop.permute.xlu0 %697
    %v700 = vadd.f32 %v689, %v698
    %s701 = scalar_lea.vmem [#allocation2], 32
    %v702 = vld [vmem:[%s701] sm:$0xff]
    %v703 = vpack.c.bf16 %v665, %v665
    %705 = vrot.lane.b32.xlu0 %v703, 64
    %v706 = vpop.permute.xlu0 %705
    %v708 = vsel %vm89, %v706, 0
    %710 = vmatprep.subr.bf16.mxu0 0
    %711 = vmatpush1.bf16.msra.mxu0 0
    %712 = vmatprep.subr.bf16.mxu0 0
    %713 = vmatpush1.bf16.msra.mxu0 0
    %714 = vmatprep.subr.bf16.mxu0 0
    %715 = vmatpush1.bf16.msra.mxu0 0
    %716 = vmatprep.subr.bf16.mxu0 0
    %717 = vmatpush1.bf16.msra.mxu0 0
    %718 = vmatprep.subr.bf16.mxu0 0
    %719 = vmatpush1.bf16.msra.mxu0 0
    %720 = vmatprep.subr.bf16.mxu0 0
    %721 = vmatpush1.bf16.msra.mxu0 0
    %722 = vmatprep.subr.bf16.mxu0 0
    %723 = vmatpush1.bf16.msra.mxu0 %v205
    %724 = vmatprep.subr.bf16.mxu0 0
    %725 = vmatpush1.bf16.msra.mxu0 %v204
    %726 = vmatprep.subr.bf16.mxu0 0
    %727 = vmatpush2.bf16.msra.mxu0 0
    %728 = vmatprep.subr.bf16.mxu0 0
    %729 = vmatpush2.bf16.msra.mxu0 0
    %730 = vmatprep.subr.bf16.mxu0 0
    %731 = vmatpush2.bf16.msra.mxu0 0
    %732 = vmatprep.subr.bf16.mxu0 0
    %733 = vmatpush2.bf16.msra.mxu0 0
    %734 = vmatprep.subr.bf16.mxu0 0
    %735 = vmatpush2.bf16.msra.mxu0 0
    %736 = vmatprep.subr.bf16.mxu0 0
    %737 = vmatpush2.bf16.msra.mxu0 0
    %738 = vmatprep.subr.bf16.mxu0 0
    %739 = vmatpush2.bf16.msra.mxu0 0
    %740 = vmatprep.subr.bf16.mxu0 0
    %741 = vmatpush2.bf16.msra.mxu0 0
    %742 = vmatprep.mubr.bf16.mxu0 0
    %743 = vmatmul.mubr.bf16.gmra.mxu0 %v708
    %v744 = vpop.f32.mrf.mxu0
    %v745 = vadd.f32 %v194, %v744
    %v746 = vpop.f32.mrf.mxu0
    %v747 = vpop.f32.mrf.mxu0
    %v748 = vpop.f32.mrf.mxu0
    %749 = vdwg.mxu0
    %v750 = vadd.f32 %v702, %v745
    %v751 = vxor.u32 %v750, 2147483648
    %v752 = vmul.f32 %v751, 1.442695
    %v753 = vpow.pop %v752
    %v754 = vadd.f32 %v753, 1.0
    %v755 = vrcp.pop %v754
    %v756 = vmul.f32 1.0, %v755
    %758 = vrot.lane.b32.xlu0 %v745, 64
    %v759 = vpop.permute.xlu0 %758
    %v761 = vmul.f32 %v756, %v759
    %763 = vrot.lane.b32.xlu0 %v761, 64
    %v764 = vpop.permute.xlu0 %763
    %v766 = vadd.f32 %v702, %v764
    %v767 = vtanh.pop %v766
    %v768 = vsub.f32 %v665, %v767
    %770 = vrot.lane.b32.xlu0 %v768, 96
    %v771 = vpop.permute.xlu0 %770
    %v773 = vmul.f32 %v756, %v771
    %775 = vrot.lane.b32.xlu0 %v773, 32
    %v776 = vpop.permute.xlu0 %775
    %v778 = vadd.f32 %v767, %v776
    %s779 = sadd.s32 %s183, 4
    %v780 = vstv %s779
    %vm781 = vcmp.lt.s32.totalorder %v780, %v177
    %v782 = vsel %vm781, 1, 0
    %783 = vset.pattern.permute.xlu0 0
    %784 = vperm.xlu0 %783, %v782
    %v785 = vpop.permute.xlu0 %784
    %vm786 = vcmp.eq.s32.totalorder %v785, 1
    %v787 = vsel %vm786, %v778, %v665
    %v788 = vmul.f32 %v778, %v298
    %790 = vrot.lane.b32.xlu0 %v788, 64
    %v791 = vpop.permute.xlu0 %790
    %v793 = vsel %vm89, %v791, 0.0
    %794 = vadd.xlane.f32.xlu0 %v793
    %v795 = vpop.xlane.xlu0 %794
    %v796 = vsel %vm781, %v795, -1e+30
    %v797 = vmax.f32 %v675, %v796
    %v798 = vsub.f32 %v675, %v797
    %v799 = vmul.f32 %v798, 1.442695
    %v800 = vpow.pop %v799
    %v801 = vsub.f32 %v796, %v797
    %v802 = vmul.f32 %v801, 1.442695
    %v803 = vpow.pop %v802
    %v804 = vmul.f32 %v800, %v683
    %v805 = vadd.f32 %v804, %v803
    %807 = vset.pattern.permute.xlu0 0
    %808 = vperm.xlu0 %807, %v800
    %v809 = vpop.permute.xlu0 %808
    %v811 = vmul.f32 %v809, %v700
    %813 = vset.pattern.permute.xlu0 0
    %814 = vperm.xlu0 %813, %v803
    %v815 = vpop.permute.xlu0 %814
    %v817 = vmul.f32 %v815, %v778
    %819 = vrot.lane.b32.xlu0 %v817, 64
    %v820 = vpop.permute.xlu0 %819
    %v822 = vadd.f32 %v811, %v820
    %s823 = scalar_lea.vmem [#allocation2], 40
    %v824 = vld [vmem:[%s823] sm:$0xff]
    %v825 = vpack.c.bf16 %v787, %v787
    %827 = vrot.lane.b32.xlu0 %v825, 64
    %v828 = vpop.permute.xlu0 %827
    %v830 = vsel %vm89, %v828, 0
    %832 = vmatprep.subr.bf16.mxu0 0
    %833 = vmatpush1.bf16.msra.mxu0 0
    %834 = vmatprep.subr.bf16.mxu0 0
    %835 = vmatpush1.bf16.msra.mxu0 0
    %836 = vmatprep.subr.bf16.mxu0 0
    %837 = vmatpush1.bf16.msra.mxu0 0
    %838 = vmatprep.subr.bf16.mxu0 0
    %839 = vmatpush1.bf16.msra.mxu0 0
    %840 = vmatprep.subr.bf16.mxu0 0
    %841 = vmatpush1.bf16.msra.mxu0 0
    %842 = vmatprep.subr.bf16.mxu0 0
    %843 = vmatpush1.bf16.msra.mxu0 0
    %844 = vmatprep.subr.bf16.mxu0 0
    %845 = vmatpush1.bf16.msra.mxu0 %v205
    %846 = vmatprep.subr.bf16.mxu0 0
    %847 = vmatpush1.bf16.msra.mxu0 %v204
    %848 = vmatprep.subr.bf16.mxu0 0
    %849 = vmatpush2.bf16.msra.mxu0 0
    %850 = vmatprep.subr.bf16.mxu0 0
    %851 = vmatpush2.bf16.msra.mxu0 0
    %852 = vmatprep.subr.bf16.mxu0 0
    %853 = vmatpush2.bf16.msra.mxu0 0
    %854 = vmatprep.subr.bf16.mxu0 0
    %855 = vmatpush2.bf16.msra.mxu0 0
    %856 = vmatprep.subr.bf16.mxu0 0
    %857 = vmatpush2.bf16.msra.mxu0 0
    %858 = vmatprep.subr.bf16.mxu0 0
    %859 = vmatpush2.bf16.msra.mxu0 0
    %860 = vmatprep.subr.bf16.mxu0 0
    %861 = vmatpush2.bf16.msra.mxu0 0
    %862 = vmatprep.subr.bf16.mxu0 0
    %863 = vmatpush2.bf16.msra.mxu0 0
    %864 = vmatprep.mubr.bf16.mxu0 0
    %865 = vmatmul.mubr.bf16.gmra.mxu0 %v830
    %v866 = vpop.f32.mrf.mxu0
    %v867 = vadd.f32 %v194, %v866
    %v868 = vpop.f32.mrf.mxu0
    %v869 = vpop.f32.mrf.mxu0
    %v870 = vpop.f32.mrf.mxu0
    %871 = vdwg.mxu0
    %v872 = vadd.f32 %v824, %v867
    %v873 = vxor.u32 %v872, 2147483648
    %v874 = vmul.f32 %v873, 1.442695
    %v875 = vpow.pop %v874
    %v876 = vadd.f32 %v875, 1.0
    %v877 = vrcp.pop %v876
    %v878 = vmul.f32 1.0, %v877
    %880 = vrot.lane.b32.xlu0 %v867, 64
    %v881 = vpop.permute.xlu0 %880
    %v883 = vmul.f32 %v878, %v881
    %885 = vrot.lane.b32.xlu0 %v883, 64
    %v886 = vpop.permute.xlu0 %885
    %v888 = vadd.f32 %v824, %v886
    %v889 = vtanh.pop %v888
    %v890 = vsub.f32 %v787, %v889
    %892 = vrot.lane.b32.xlu0 %v890, 96
    %v893 = vpop.permute.xlu0 %892
    %v895 = vmul.f32 %v878, %v893
    %897 = vrot.lane.b32.xlu0 %v895, 32
    %v898 = vpop.permute.xlu0 %897
    %v900 = vadd.f32 %v889, %v898
    %s901 = sadd.s32 %s183, 5
    %v902 = vstv %s901
    %vm903 = vcmp.lt.s32.totalorder %v902, %v177
    %v904 = vsel %vm903, 1, 0
    %905 = vset.pattern.permute.xlu0 0
    %906 = vperm.xlu0 %905, %v904
    %v907 = vpop.permute.xlu0 %906
    %vm908 = vcmp.eq.s32.totalorder %v907, 1
    %v909 = vsel %vm908, %v900, %v787
    %v910 = vmul.f32 %v900, %v298
    %912 = vrot.lane.b32.xlu0 %v910, 64
    %v913 = vpop.permute.xlu0 %912
    %v915 = vsel %vm89, %v913, 0.0
    %916 = vadd.xlane.f32.xlu0 %v915
    %v917 = vpop.xlane.xlu0 %916
    %v918 = vsel %vm903, %v917, -1e+30
    %v919 = vmax.f32 %v797, %v918
    %v920 = vsub.f32 %v797, %v919
    %v921 = vmul.f32 %v920, 1.442695
    %v922 = vpow.pop %v921
    %v923 = vsub.f32 %v918, %v919
    %v924 = vmul.f32 %v923, 1.442695
    %v925 = vpow.pop %v924
    %v926 = vmul.f32 %v922, %v805
    %v927 = vadd.f32 %v926, %v925
    %929 = vset.pattern.permute.xlu0 0
    %930 = vperm.xlu0 %929, %v922
    %v931 = vpop.permute.xlu0 %930
    %v933 = vmul.f32 %v931, %v822
    %935 = vset.pattern.permute.xlu0 0
    %936 = vperm.xlu0 %935, %v925
    %v937 = vpop.permute.xlu0 %936
    %v939 = vmul.f32 %v937, %v900
    %941 = vrot.lane.b32.xlu0 %v939, 64
    %v942 = vpop.permute.xlu0 %941
    %v944 = vadd.f32 %v933, %v942
    %s945 = scalar_lea.vmem [#allocation2], 48
    %v946 = vld [vmem:[%s945] sm:$0xff]
    %v947 = vpack.c.bf16 %v909, %v909
    %949 = vrot.lane.b32.xlu0 %v947, 64
    %v950 = vpop.permute.xlu0 %949
    %v952 = vsel %vm89, %v950, 0
    %954 = vmatprep.subr.bf16.mxu0 0
    %955 = vmatpush1.bf16.msra.mxu0 0
    %956 = vmatprep.subr.bf16.mxu0 0
    %957 = vmatpush1.bf16.msra.mxu0 0
    %958 = vmatprep.subr.bf16.mxu0 0
    %959 = vmatpush1.bf16.msra.mxu0 0
    %960 = vmatprep.subr.bf16.mxu0 0
    %961 = vmatpush1.bf16.msra.mxu0 0
    %962 = vmatprep.subr.bf16.mxu0 0
    %963 = vmatpush1.bf16.msra.mxu0 0
    %964 = vmatprep.subr.bf16.mxu0 0
    %965 = vmatpush1.bf16.msra.mxu0 0
    %966 = vmatprep.subr.bf16.mxu0 0
    %967 = vmatpush1.bf16.msra.mxu0 %v205
    %968 = vmatprep.subr.bf16.mxu0 0
    %969 = vmatpush1.bf16.msra.mxu0 %v204
    %970 = vmatprep.subr.bf16.mxu0 0
    %971 = vmatpush2.bf16.msra.mxu0 0
    %972 = vmatprep.subr.bf16.mxu0 0
    %973 = vmatpush2.bf16.msra.mxu0 0
    %974 = vmatprep.subr.bf16.mxu0 0
    %975 = vmatpush2.bf16.msra.mxu0 0
    %976 = vmatprep.subr.bf16.mxu0 0
    %977 = vmatpush2.bf16.msra.mxu0 0
    %978 = vmatprep.subr.bf16.mxu0 0
    %979 = vmatpush2.bf16.msra.mxu0 0
    %980 = vmatprep.subr.bf16.mxu0 0
    %981 = vmatpush2.bf16.msra.mxu0 0
    %982 = vmatprep.subr.bf16.mxu0 0
    %983 = vmatpush2.bf16.msra.mxu0 0
    %984 = vmatprep.subr.bf16.mxu0 0
    %985 = vmatpush2.bf16.msra.mxu0 0
    %986 = vmatprep.mubr.bf16.mxu0 0
    %987 = vmatmul.mubr.bf16.gmra.mxu0 %v952
    %v988 = vpop.f32.mrf.mxu0
    %v989 = vadd.f32 %v194, %v988
    %v990 = vpop.f32.mrf.mxu0
    %v991 = vpop.f32.mrf.mxu0
    %v992 = vpop.f32.mrf.mxu0
    %993 = vdwg.mxu0
    %v994 = vadd.f32 %v946, %v989
    %v995 = vxor.u32 %v994, 2147483648
    %v996 = vmul.f32 %v995, 1.442695
    %v997 = vpow.pop %v996
    %v998 = vadd.f32 %v997, 1.0
    %v999 = vrcp.pop %v998
    %v1000 = vmul.f32 1.0, %v999
    %1002 = vrot.lane.b32.xlu0 %v989, 64
    %v1003 = vpop.permute.xlu0 %1002
    %v1005 = vmul.f32 %v1000, %v1003
    %1007 = vrot.lane.b32.xlu0 %v1005, 64
    %v1008 = vpop.permute.xlu0 %1007
    %v1010 = vadd.f32 %v946, %v1008
    %v1011 = vtanh.pop %v1010
    %v1012 = vsub.f32 %v909, %v1011
    %1014 = vrot.lane.b32.xlu0 %v1012, 96
    %v1015 = vpop.permute.xlu0 %1014
    %v1017 = vmul.f32 %v1000, %v1015
    %1019 = vrot.lane.b32.xlu0 %v1017, 32
    %v1020 = vpop.permute.xlu0 %1019
    %v1022 = vadd.f32 %v1011, %v1020
    %s1023 = sadd.s32 %s183, 6
    %v1024 = vstv %s1023
    %vm1025 = vcmp.lt.s32.totalorder %v1024, %v177
    %v1026 = vsel %vm1025, 1, 0
    %1027 = vset.pattern.permute.xlu0 0
    %1028 = vperm.xlu0 %1027, %v1026
    %v1029 = vpop.permute.xlu0 %1028
    %vm1030 = vcmp.eq.s32.totalorder %v1029, 1
    %v1031 = vsel %vm1030, %v1022, %v909
    %v1032 = vmul.f32 %v1022, %v298
    %1034 = vrot.lane.b32.xlu0 %v1032, 64
    %v1035 = vpop.permute.xlu0 %1034
    %v1037 = vsel %vm89, %v1035, 0.0
    %1038 = vadd.xlane.f32.xlu0 %v1037
    %v1039 = vpop.xlane.xlu0 %1038
    %v1040 = vsel %vm1025, %v1039, -1e+30
    %v1041 = vmax.f32 %v919, %v1040
    %v1042 = vsub.f32 %v919, %v1041
    %v1043 = vmul.f32 %v1042, 1.442695
    %v1044 = vpow.pop %v1043
    %v1045 = vsub.f32 %v1040, %v1041
    %v1046 = vmul.f32 %v1045, 1.442695
    %v1047 = vpow.pop %v1046
    %v1048 = vmul.f32 %v1044, %v927
    %v1049 = vadd.f32 %v1048, %v1047
    %1051 = vset.pattern.permute.xlu0 0
    %1052 = vperm.xlu0 %1051, %v1044
    %v1053 = vpop.permute.xlu0 %1052
    %v1055 = vmul.f32 %v1053, %v944
    %1057 = vset.pattern.permute.xlu0 0
    %1058 = vperm.xlu0 %1057, %v1047
    %v1059 = vpop.permute.xlu0 %1058
    %v1061 = vmul.f32 %v1059, %v1022
    %1063 = vrot.lane.b32.xlu0 %v1061, 64
    %v1064 = vpop.permute.xlu0 %1063
    %v1066 = vadd.f32 %v1055, %v1064
    %s1067 = scalar_lea.vmem [#allocation2], 56
    %v1068 = vld [vmem:[%s1067] sm:$0xff]
    %v1069 = vpack.c.bf16 %v1031, %v1031
    %1071 = vrot.lane.b32.xlu0 %v1069, 64
    %v1072 = vpop.permute.xlu0 %1071
    %v1074 = vsel %vm89, %v1072, 0
    %1076 = vmatprep.subr.bf16.mxu0 0
    %1077 = vmatpush1.bf16.msra.mxu0 0
    %1078 = vmatprep.subr.bf16.mxu0 0
    %1079 = vmatpush1.bf16.msra.mxu0 0
    %1080 = vmatprep.subr.bf16.mxu0 0
    %1081 = vmatpush1.bf16.msra.mxu0 0
    %1082 = vmatprep.subr.bf16.mxu0 0
    %1083 = vmatpush1.bf16.msra.mxu0 0
    %1084 = vmatprep.subr.bf16.mxu0 0
    %1085 = vmatpush1.bf16.msra.mxu0 0
    %1086 = vmatprep.subr.bf16.mxu0 0
    %1087 = vmatpush1.bf16.msra.mxu0 0
    %1088 = vmatprep.subr.bf16.mxu0 0
    %1089 = vmatpush1.bf16.msra.mxu0 %v205
    %1090 = vmatprep.subr.bf16.mxu0 0
    %1091 = vmatpush1.bf16.msra.mxu0 %v204
    %1092 = vmatprep.subr.bf16.mxu0 0
    %1093 = vmatpush2.bf16.msra.mxu0 0
    %1094 = vmatprep.subr.bf16.mxu0 0
    %1095 = vmatpush2.bf16.msra.mxu0 0
    %1096 = vmatprep.subr.bf16.mxu0 0
    %1097 = vmatpush2.bf16.msra.mxu0 0
    %1098 = vmatprep.subr.bf16.mxu0 0
    %1099 = vmatpush2.bf16.msra.mxu0 0
    %1100 = vmatprep.subr.bf16.mxu0 0
    %1101 = vmatpush2.bf16.msra.mxu0 0
    %1102 = vmatprep.subr.bf16.mxu0 0
    %1103 = vmatpush2.bf16.msra.mxu0 0
    %1104 = vmatprep.subr.bf16.mxu0 0
    %1105 = vmatpush2.bf16.msra.mxu0 0
    %1106 = vmatprep.subr.bf16.mxu0 0
    %1107 = vmatpush2.bf16.msra.mxu0 0
    %1108 = vmatprep.mubr.bf16.mxu0 0
    %1109 = vmatmul.mubr.bf16.gmra.mxu0 %v1074
    %v1110 = vpop.f32.mrf.mxu0
    %v1111 = vadd.f32 %v194, %v1110
    %v1112 = vpop.f32.mrf.mxu0
    %v1113 = vpop.f32.mrf.mxu0
    %v1114 = vpop.f32.mrf.mxu0
    %1115 = vdwg.mxu0
    %v1116 = vadd.f32 %v1068, %v1111
    %v1117 = vxor.u32 %v1116, 2147483648
    %v1118 = vmul.f32 %v1117, 1.442695
    %v1119 = vpow.pop %v1118
    %v1120 = vadd.f32 %v1119, 1.0
    %v1121 = vrcp.pop %v1120
    %v1122 = vmul.f32 1.0, %v1121
    %1124 = vrot.lane.b32.xlu0 %v1111, 64
    %v1125 = vpop.permute.xlu0 %1124
    %v1127 = vmul.f32 %v1122, %v1125
    %1129 = vrot.lane.b32.xlu0 %v1127, 64
    %v1130 = vpop.permute.xlu0 %1129
    %v1132 = vadd.f32 %v1068, %v1130
    %v1133 = vtanh.pop %v1132
    %v1134 = vsub.f32 %v1031, %v1133
    %1136 = vrot.lane.b32.xlu0 %v1134, 96
    %v1137 = vpop.permute.xlu0 %1136
    %v1139 = vmul.f32 %v1122, %v1137
    %1141 = vrot.lane.b32.xlu0 %v1139, 32
    %v1142 = vpop.permute.xlu0 %1141
    %v1144 = vadd.f32 %v1133, %v1142
    %s1145 = sadd.s32 %s183, 7
    %v1146 = vstv %s1145
    %vm1147 = vcmp.lt.s32.totalorder %v1146, %v177
    %v1148 = vsel %vm1147, 1, 0
    %1149 = vset.pattern.permute.xlu0 0
    %1150 = vperm.xlu0 %1149, %v1148
    %v1151 = vpop.permute.xlu0 %1150
    %vm1152 = vcmp.eq.s32.totalorder %v1151, 1
    %v1153 = vsel %vm1152, %v1144, %v1031
    %v1154 = vmul.f32 %v1144, %v298
    %1156 = vrot.lane.b32.xlu0 %v1154, 64
    %v1157 = vpop.permute.xlu0 %1156
    %v1159 = vsel %vm89, %v1157, 0.0
    %1160 = vadd.xlane.f32.xlu0 %v1159
    %v1161 = vpop.xlane.xlu0 %1160
    %v1162 = vsel %vm1147, %v1161, -1e+30
    %v1163 = vmax.f32 %v1041, %v1162
    %v1164 = vsub.f32 %v1041, %v1163
    %v1165 = vmul.f32 %v1164, 1.442695
    %v1166 = vpow.pop %v1165
    %v1167 = vsub.f32 %v1162, %v1163
    %v1168 = vmul.f32 %v1167, 1.442695
    %v1169 = vpow.pop %v1168
    %v1170 = vmul.f32 %v1166, %v1049
    %v1171 = vadd.f32 %v1170, %v1169
    %1173 = vset.pattern.permute.xlu0 0
    %1174 = vperm.xlu0 %1173, %v1166
    %v1175 = vpop.permute.xlu0 %1174
    %v1177 = vmul.f32 %v1175, %v1066
    %1179 = vset.pattern.permute.xlu0 0
    %1180 = vperm.xlu0 %1179, %v1169
    %v1181 = vpop.permute.xlu0 %1180
    %v1183 = vmul.f32 %v1181, %v1144
    %1185 = vrot.lane.b32.xlu0 %v1183, 64
    %v1186 = vpop.permute.xlu0 %1185
    %v1188 = vadd.f32 %v1177, %v1186
    %1190 = vrot.lane.b32.xlu0 %v1153, 64
    %v1191 = vpop.permute.xlu0 %1190
    %1193 = vst.msk [vmem:[#allocation3] sm:$0xff] %vm89, %v1191
    %vm1194 = vcmask 7168
    %1195 = vst.msk [vmem:[#allocation4] sm:$0xff] %vm1194, %v1163
    %1196 = vst.msk [vmem:[#allocation5] sm:$0xff] %vm1194, %v1171
    %1197 = vst.msk [vmem:[#allocation6] sm:$0xff] %vm89, %v1188
    // Predicated region
    $region34: #{tpu_custom_call.1} parent=1 // pred_check
      %p1198 = pneg %p28
    $region35: #{tpu_custom_call.1} parent=1 // pred_check_branch
      %1200 = sbr.rel (%p1198) target = $region37
    $region36: #{tpu_custom_call.1} parent=1 // pred_region
      %1202 = vset.pattern.permute.xlu0 0
      %1203 = vperm.xlu0 %1202, %v1171
      %v1204 = vpop.permute.xlu0 %1203
      %v1206 = vrcp.pop %v1204
      %v1207 = vmul.f32 %v1188, %v1206
      %v1208 = vmul.f32 %v1153, 0.5
      %v1209 = vmul.f32 %v1207, 0.5
      %1211 = vrot.lane.b32.xlu0 %v1209, 64
      %v1212 = vpop.permute.xlu0 %1211
      %v1214 = vadd.f32 %v1208, %v1212
      %1216 = vrot.lane.b32.xlu0 %v1214, 64
      %v1217 = vpop.permute.xlu0 %1216
      %1219 = vst.msk [vmem:[#allocation7] sm:$0xff] %vm89, %v1217
    $region37: #{tpu_custom_call.1} parent=1 // pred_fallthru
      _
    // Predicated region
    $region38: #{tpu_custom_call.1} parent=1 // pred_check
      _
    $region39: #{tpu_custom_call.1} parent=1 // pred_check_branch
      %1221 = sbr.rel (0) target = $region41
    $region40: #{tpu_custom_call.1} parent=1 // pred_region
      %s1223 = ssub.s32 128, 128
      %1224 = vsyncadd [#allocation8], %s1223
      %s1226 = sshll.u32 [#allocation7], 4
      %s1227 = int_to_ptr.vmem [resolvable:$true] %s1226
      %1229 = dma.vmem_to_hbm [thread:$0]  %s1227, 128, %s7, [#allocation8]
    $region41: #{tpu_custom_call.1} parent=1 // pred_fallthru
      _
    // Predicated region
    $region42: #{tpu_custom_call.1} parent=1 // pred_check
      _
    $region43: #{tpu_custom_call.1} parent=1 // pred_check_branch
      %1231 = sbr.rel (0) target = $region45
    $region44: #{tpu_custom_call.1} parent=1 // pred_region
      %1232 = dma.done [#allocation8], 128
    $region45: #{tpu_custom_call.1} parent=1 // pred_fallthru
      _
    %1233 = vsyncpa [#allocation8], 1

</llo_original>
